<compile_context>
chip_gen: v7x
topology: tpu7x:2x2x1
jax: 0.10.0
libtpu: 0.0.40
codegen_flags: <defaults>
</compile_context>

<pallas_src>
import jax
import jax.numpy as jnp
from jax.experimental import pallas as pl
from jax.experimental.pallas import tpu as pltpu

DIM = 256        # feature dim of the ResidualBlock (multiple of 128 lanes)
TM_MAX = 1024    # max batch rows per grid step (tunable; VMEM-safe on v5e/v6e/v7x)
BN_EPS = 1e-5


def _residual_block_kernel(x_ref, w1_ref, b1_ref, w2_ref, b2_ref, o_ref):
    """One batch tile: x (tm, DIM) bf16; w* bf16 (DIM, DIM); b* f32 (1, DIM)."""
    x_bf = x_ref[...]                                        # (tm, DIM) bf16

    # fc1 + folded bn1 -> ReLU (bf16 MXU inputs, f32 accumulate/epilogue)
    h = jnp.dot(x_bf, w1_ref[...],
                preferred_element_type=jnp.float32) + b1_ref[...]
    h = jnp.maximum(h, 0.0)

    # Dropout: identity in eval mode.

    # fc2 + folded bn2
    o = jnp.dot(h.astype(jnp.bfloat16), w2_ref[...],
                preferred_element_type=jnp.float32) + b2_ref[...]

    # residual add (f32) + ReLU, lane-dense f32 store
    o_ref[...] = jnp.maximum(o + x_bf.astype(jnp.float32), 0.0)


def fold_params(p):
    """Fold eval-mode BatchNorm into the Linear weights/bias (once, offline)."""
    def fold(W, b, gamma, beta, rmean, rvar):
        s = gamma / jnp.sqrt(rvar + BN_EPS)                  # (DIM,)
        w_folded = (W.T * s[None, :]).astype(jnp.bfloat16)   # (in, out), col-scaled
        b_folded = (b * s + (beta - rmean * s)).reshape(1, DIM).astype(jnp.float32)
        return w_folded, b_folded

    w1, b1 = fold(p["fc1_w"], p["fc1_b"], p["bn1_g"], p["bn1_b"], p["bn1_rm"], p["bn1_rv"])
    w2, b2 = fold(p["fc2_w"], p["fc2_b"], p["bn2_g"], p["bn2_b"], p["bn2_rm"], p["bn2_rv"])
    return {"w1": w1, "b1": b1, "w2": w2, "b2": b2}


def _choose_tile(B, tm_max):
    """Pick a batch tile that divides B exactly (no pad / output slice).

    Preference order: even grid of length >= 2 (v7x two-TC sharding) >
    grid >= 2 > tile is a multiple of 256 rows > larger tile.
    Returns None if no 8-row-multiple divisor exists (caller falls back).
    """
    cands = [t for t in range(8, min(B, tm_max) + 1, 8) if B % t == 0]
    if not cands:
        return None

    def score(t):
        g = B // t
        return (g >= 2 and g % 2 == 0, g >= 2, t % 256 == 0, t)

    return max(cands, key=score)


def residual_block_forward(x, folded, tm_max=TM_MAX):
    """x: (B, DIM) float32 -> (B, DIM) float32."""
    B, D = x.shape
    assert D == DIM

    # Stream activations in bf16 (kernel is HBM-bound; matmuls use bf16 anyway).
    x_in = x.astype(jnp.bfloat16)

    tm = _choose_tile(B, tm_max)
    if tm is None:
        if B <= tm_max:
            tm = B                          # single full-extent block, no padding
        else:
            tm = tm_max                     # rare ragged large batch: minimal pad
            pad = (-B) % tm
            x_in = jnp.pad(x_in, ((0, pad), (0, 0)))
    Bp = x_in.shape[0]
    grid = (Bp // tm,)

    act_in_spec = pl.BlockSpec((tm, DIM), lambda i: (i, 0))
    act_out_spec = pl.BlockSpec((tm, DIM), lambda i: (i, 0))
    w_spec = pl.BlockSpec((DIM, DIM), lambda i: (0, 0))       # VMEM-resident weights
    b_spec = pl.BlockSpec((1, DIM), lambda i: (0, 0))

    cost = pl.CostEstimate(
        flops=4 * Bp * DIM * DIM,                             # two (tm,DIM)x(DIM,DIM) matmuls
        transcendentals=0,
        bytes_accessed=2 * Bp * DIM                           # x in bf16
        + 4 * Bp * DIM                                        # out in f32
        + 2 * 2 * DIM * DIM                                   # two bf16 weight mats
        + 2 * 4 * DIM,                                        # two f32 biases
    )

    out = pl.pallas_call(
        _residual_block_kernel,
        out_shape=jax.ShapeDtypeStruct((Bp, DIM), jnp.float32),
        grid=grid,
        in_specs=[act_in_spec, w_spec, b_spec, w_spec, b_spec],
        out_specs=act_out_spec,
        compiler_params=pltpu.CompilerParams(
            dimension_semantics=("parallel",),                # megacore on v7x
        ),
        cost_estimate=cost,
    )(x_in, folded["w1"], folded["b1"], folded["w2"], folded["b2"])

    return out if Bp == B else out[:B]


def residual_block_reference(x, p):
    """Pure-JAX f32 reference of the PyTorch eval-mode forward."""
    def bn(y, g, b, rm, rv):
        return (y - rm) / jnp.sqrt(rv + BN_EPS) * g + b

    h = x @ p["fc1_w"].T + p["fc1_b"]
    h = jnp.maximum(bn(h, p["bn1_g"], p["bn1_b"], p["bn1_rm"], p["bn1_rv"]), 0.0)
    # dropout: identity in eval mode
    o = h @ p["fc2_w"].T + p["fc2_b"]
    o = bn(o, p["bn2_g"], p["bn2_b"], p["bn2_rm"], p["bn2_rv"])
    return jnp.maximum(o + x, 0.0)


def make_params(key):
    ks = jax.random.split(key, 12)

    def lin_w(k):
        return jax.random.normal(k, (DIM, DIM), jnp.float32) / jnp.sqrt(jnp.float32(DIM))

    return {
        "fc1_w": lin_w(ks[0]),
        "fc1_b": 0.1 * jax.random.normal(ks[1], (DIM,), jnp.float32),
        "bn1_g": 1.0 + 0.1 * jax.random.normal(ks[2], (DIM,), jnp.float32),
        "bn1_b": 0.1 * jax.random.normal(ks[3], (DIM,), jnp.float32),
        "bn1_rm": 0.1 * jax.random.normal(ks[4], (DIM,), jnp.float32),
        "bn1_rv": 1.0 + 0.1 * jax.random.uniform(ks[5], (DIM,), jnp.float32),
        "fc2_w": lin_w(ks[6]),
        "fc2_b": 0.1 * jax.random.normal(ks[7], (DIM,), jnp.float32),
        "bn2_g": 1.0 + 0.1 * jax.random.normal(ks[8], (DIM,), jnp.float32),
        "bn2_b": 0.1 * jax.random.normal(ks[9], (DIM,), jnp.float32),
        "bn2_rm": 0.1 * jax.random.normal(ks[10], (DIM,), jnp.float32),
        "bn2_rv": 1.0 + 0.1 * jax.random.uniform(ks[11], (DIM,), jnp.float32),
    }


if __name__ == "__main__":
    key = jax.random.PRNGKey(0)
    k_x, k_x2, k_p = jax.random.split(key, 3)

    params = make_params(k_p)
    folded = fold_params(params)

    # Main case: B divisible by the chosen tile -> 2 even grid steps of 256 rows,
    # no host-side padding / slicing.
    B = 512
    x = jax.random.normal(k_x, (B, DIM), jnp.float32)
    out = jax.block_until_ready(residual_block_forward(x, folded))
    ref = residual_block_reference(x, params)
    assert out.shape == (B, DIM), out.shape
    # bf16 MXU weights + bf16-streamed activations vs f32 reference -> relaxed tol
    max_err = float(jnp.max(jnp.abs(out - ref)))
    assert max_err < 5e-2, f"max abs err {max_err}"

    # Ragged case: B not a multiple of 8 -> single full-extent block, no padding.
    B2 = 100
    x2 = jax.random.normal(k_x2, (B2, DIM), jnp.float32)
    out2 = jax.block_until_ready(residual_block_forward(x2, folded))
    ref2 = residual_block_reference(x2, params)
    assert out2.shape == (B2, DIM), out2.shape
    max_err2 = float(jnp.max(jnp.abs(out2 - ref2)))
    assert max_err2 < 5e-2, f"max abs err {max_err2}"

    print("KERNEL_OK")
</pallas_src>

<mosaic_0001>
module attributes {stable_mosaic.version = 11 : i64} {
  func.func @_residual_block_kernel(%arg0: i32, %arg1: memref<256x256xbf16, #tpu.memory_space<vmem>>, %arg2: memref<256x256xbf16, #tpu.memory_space<vmem>>, %arg3: memref<1x256xf32, #tpu.memory_space<vmem>>, %arg4: memref<256x256xbf16, #tpu.memory_space<vmem>>, %arg5: memref<1x256xf32, #tpu.memory_space<vmem>>, %arg6: memref<256x256xf32, #tpu.memory_space<vmem>>) attributes {dimension_semantics = [#tpu.dimension_semantics<parallel>], iteration_bounds = array<i64: 2>, scalar_prefetch = 0 : i64, scratch_operands = 0 : i64, tpu.core_type = #tpu.core_type<tc>, window_params = [{transform_indices = @transform_0, window_bounds = array<i64: 256, 256>}, {pipeline_mode = #tpu.pipeline_mode<synchronous>, transform_indices = @transform_1, window_bounds = array<i64: 256, 256>}, {pipeline_mode = #tpu.pipeline_mode<synchronous>, transform_indices = @transform_2, window_bounds = array<i64: 1, 256>}, {pipeline_mode = #tpu.pipeline_mode<synchronous>, transform_indices = @transform_3, window_bounds = array<i64: 256, 256>}, {pipeline_mode = #tpu.pipeline_mode<synchronous>, transform_indices = @transform_4, window_bounds = array<i64: 1, 256>}, {transform_indices = @transform_5, window_bounds = array<i64: 256, 256>}]} {
    %c0 = arith.constant 0 : index
    %c0_0 = arith.constant 0 : index
    %0 = vector.load %arg1[%c0, %c0_0] : memref<256x256xbf16, #tpu.memory_space<vmem>>, vector<256x256xbf16>
    %c0_1 = arith.constant 0 : index
    %c0_2 = arith.constant 0 : index
    %1 = vector.load %arg2[%c0_1, %c0_2] : memref<256x256xbf16, #tpu.memory_space<vmem>>, vector<256x256xbf16>
    %cst = arith.constant dense<0.000000e+00> : vector<256x256xf32>
    %2 = tpu.matmul %0, %1, %cst {dimension_numbers = #tpu.dot_dimension_numbers<[1], [0], [0], [1], [0, 0, 1, 1], [], []>} : vector<256x256xbf16>, vector<256x256xbf16>, vector<256x256xf32> -> vector<256x256xf32>
    %c0_3 = arith.constant 0 : index
    %c0_4 = arith.constant 0 : index
    %3 = vector.load %arg3[%c0_3, %c0_4] : memref<1x256xf32, #tpu.memory_space<vmem>>, vector<1x256xf32>
    %4 = vector.broadcast %3 : vector<1x256xf32> to vector<256x256xf32>
    %5 = arith.addf %2, %4 : vector<256x256xf32>
    %cst_5 = arith.constant 0.000000e+00 : f32
    %6 = vector.broadcast %cst_5 : f32 to vector<256x256xf32>
    %7 = arith.maximumf %5, %6 : vector<256x256xf32>
    %8 = arith.truncf %7 : vector<256x256xf32> to vector<256x256xbf16>
    %c0_6 = arith.constant 0 : index
    %c0_7 = arith.constant 0 : index
    %9 = vector.load %arg4[%c0_6, %c0_7] : memref<256x256xbf16, #tpu.memory_space<vmem>>, vector<256x256xbf16>
    %cst_8 = arith.constant dense<0.000000e+00> : vector<256x256xf32>
    %10 = tpu.matmul %8, %9, %cst_8 {dimension_numbers = #tpu.dot_dimension_numbers<[1], [0], [0], [1], [0, 0, 1, 1], [], []>} : vector<256x256xbf16>, vector<256x256xbf16>, vector<256x256xf32> -> vector<256x256xf32>
    %c0_9 = arith.constant 0 : index
    %c0_10 = arith.constant 0 : index
    %11 = vector.load %arg5[%c0_9, %c0_10] : memref<1x256xf32, #tpu.memory_space<vmem>>, vector<1x256xf32>
    %12 = vector.broadcast %11 : vector<1x256xf32> to vector<256x256xf32>
    %13 = arith.addf %10, %12 : vector<256x256xf32>
    %14 = arith.extf %0 : vector<256x256xbf16> to vector<256x256xf32>
    %15 = arith.addf %13, %14 : vector<256x256xf32>
    %cst_11 = arith.constant 0.000000e+00 : f32
    %16 = vector.broadcast %cst_11 : f32 to vector<256x256xf32>
    %17 = arith.maximumf %15, %16 : vector<256x256xf32>
    %c0_12 = arith.constant 0 : index
    %c0_13 = arith.constant 0 : index
    %18 = vector.load %arg6[%c0_12, %c0_13] : memref<256x256xf32, #tpu.memory_space<vmem>>, vector<256x256xf32>
    tpu.vector_store %arg6[%c0_12, %c0_13], %17 {strides = array<i32>} : memref<256x256xf32, #tpu.memory_space<vmem>>, vector<256x256xf32>,
    return
  }
  func.func @transform_0(%arg0: i32) -> (i32, i32) {
    %c0_i32 = arith.constant 0 : i32
    %c0_i32_0 = arith.constant 0 : i32
    return %arg0, %c0_i32 : i32, i32
  }
  func.func @transform_1(%arg0: i32) -> (i32, i32) {
    %c0_i32 = arith.constant 0 : i32
    %c0_i32_0 = arith.constant 0 : i32
    %c0_i32_1 = arith.constant 0 : i32
    return %c0_i32, %c0_i32_0 : i32, i32
  }
  func.func @transform_2(%arg0: i32) -> (i32, i32) {
    %c0_i32 = arith.constant 0 : i32
    %c0_i32_0 = arith.constant 0 : i32
    %c0_i32_1 = arith.constant 0 : i32
    return %c0_i32, %c0_i32_0 : i32, i32
  }
  func.func @transform_3(%arg0: i32) -> (i32, i32) {
    %c0_i32 = arith.constant 0 : i32
    %c0_i32_0 = arith.constant 0 : i32
    %c0_i32_1 = arith.constant 0 : i32
    return %c0_i32, %c0_i32_0 : i32, i32
  }
  func.func @transform_4(%arg0: i32) -> (i32, i32) {
    %c0_i32 = arith.constant 0 : i32
    %c0_i32_0 = arith.constant 0 : i32
    %c0_i32_1 = arith.constant 0 : i32
    return %c0_i32, %c0_i32_0 : i32, i32
  }
  func.func @transform_5(%arg0: i32) -> (i32, i32) {
    %c0_i32 = arith.constant 0 : i32
    %c0_i32_0 = arith.constant 0 : i32
    return %arg0, %c0_i32 : i32, i32
  }
}

</mosaic_0001>

<llo_original>
// kernel: tpu_custom_call.1
$region0: #{tpu_custom_call.1}
  #allocation0 [shape = 'u32[]', space=smem, size = 0x4, offset = 0x4, fixed_abs, tag = 'smem constant byte address 0x4 - core index']
  #allocation1 [shape = 'u32[144,128]{1,0:T(1,128)}', space=vmem, size = 0x12000, scoped, tag = 'internal scratch']
  %s0 = inlined_call_operand.hbm [shape: bf16[512,256], index: 0, kind: input, shape index: {}]
  %s1 = inlined_call_operand.hbm [shape: bf16[256,256], index: 1, kind: input, shape index: {}]
  %s2 = inlined_call_operand.vmem [shape: f32[1,256], index: 2, kind: input, shape index: {}]
  %s3 = inlined_call_operand.hbm [shape: bf16[256,256], index: 3, kind: input, shape index: {}]
  %s4 = inlined_call_operand.vmem [shape: f32[1,256], index: 4, kind: input, shape index: {}]
  %s5 = inlined_call_operand.hbm [shape: f32[512,256], index: 5, kind: output, shape index: {}]
  %s6 = sld [smem:[#allocation0]]
  $region65: #{tpu_custom_call.1} parent=0
    _
  %s8 = ssub.s32 1, %s6
  %s9 = scalar_select 0, %s8, %s6
  $region1: #{tpu_custom_call.1} parent=0
    #allocation2 [shape = 'u8[262144]{0}', space=vmem, size = 0x40000, scoped, tag = 'input window, operand 0']
    #allocation3 [shape = 's32[2]{0}', space=sflag, size = 0x8, scoped, tag = 'scoped memory for tpu_custom_call.1']
    #allocation4 [shape = 's32[2]{0}', space=sflag, size = 0x8, scoped, tag = 'scoped memory for tpu_custom_call.1']
    #allocation5 [shape = 'u8[131072]{0}', space=vmem, size = 0x20000, scoped, tag = 'input window, operand 1, single buffered']
    #allocation6 [shape = 's32[1]{0}', space=sflag, size = 0x4, scoped, tag = 'scoped memory for tpu_custom_call.1']
    #allocation7 [shape = 'u8[131072]{0}', space=vmem, size = 0x20000, scoped, tag = 'input window, operand 3, single buffered']
    #allocation8 [shape = 'u8[524288]{0}', space=vmem, size = 0x80000, scoped, tag = 'output window, operand 0']
    %10 = vsyncpa [#allocation3], 0
    %s11 = scalar_lea.sflag [#allocation3], 1
    %12 = vsyncpa %s11, 0
    %13 = vsyncpa [#allocation6], 0
    %14 = vsyncpa [#allocation4], 0
    %s15 = scalar_lea.sflag [#allocation4], 1
    %16 = vsyncpa %s15, 0
    loop: start=0, step=1, limit=4
    $region2: #{tpu_custom_call.1} parent=1 // loop_pre_header
      _
    $region3: #{tpu_custom_call.1} parent=1 // loop_header
      %s18 = sphi 0, %s22
      %p19 = scmp.ge.s32.totalorder %s18, 4
      %s28 = sphi 0, %s30
      %s31 = sphi 0, %s28
      %s32 = sphi 0, %s31
      %s48 = sphi 0, %s32
      %s52 = sphi 0, %s52
      %s54 = sphi 0, %s52
      %s55 = sphi 0, %s54
      %s69 = sphi 0, %s55
      %s73 = sphi 0, %s73
      %s75 = sphi 0, %s73
      %s76 = sphi 0, %s75
      %s90 = sphi 0, %s76
      %s94 = sphi 0, %s94
      %s96 = sphi 0, %s94
      %s97 = sphi 0, %s96
      %s111 = sphi 0, %s97
      %s115 = sphi 0, %s115
      %s117 = sphi 0, %s115
      %s118 = sphi 0, %s117
      %s132 = sphi 0, %s118
      %s138 = sphi 0, %s140
      %s141 = sphi 0, %s138
      %s142 = sphi 0, %s141
      %s158 = sphi 0, %s142
    $region4: #{tpu_custom_call.1} parent=1 // loop_header_branch
      %21 = sbr.rel (%p19) target = $region8
    $region5: #{tpu_custom_call.1} parent=1 // loop_body
      %s23 = ssub.s32 %s18, 1
      %s24 = ssub.s32 %s18, 2
      %s25 = sadd.s32 %s18, 1
      %s26 = ssub.s32 %s18, %s25
      %p27 = scmp.eq.s32.totalorder %s26, 0
      %s29 = sadd.s32 %s28, 1
      %s30 = scalar_select %p27, %s28, %s29
      %p33 = pneg %p27
      %p34 = scmp.eq.s32.totalorder %s18, 1
      %p35 = por %p33, %p34
      %p36 = scmp.ne.s32.totalorder %s28, %s31
      %p37 = scmp.eq.s32.totalorder %s18, 0
      %p38 = por %p36, %p37
      %p39 = scmp.ne.s32.totalorder %s28, %s31
      %p40 = scmp.eq.s32.totalorder %s23, 1
      %p41 = por %p39, %p40
      %p42 = scmp.ne.s32.totalorder %s31, %s32
      %p43 = scmp.eq.s32.totalorder %s23, 0
      %p44 = por %p42, %p43
      %p45 = scmp.ne.s32.totalorder %s31, %s32
      %p46 = scmp.eq.s32.totalorder %s24, 1
      %p47 = por %p45, %p46
      %p49 = scmp.ne.s32.totalorder %s32, %s48
      %p50 = scmp.eq.s32.totalorder %s24, 0
      %p51 = por %p49, %p50
      %s53 = sadd.s32 %s52, 1
      %p56 = scmp.eq.s32.totalorder %s18, 1
      %p57 = scmp.ne.s32.totalorder %s52, %s54
      %p58 = scmp.eq.s32.totalorder %s18, 0
      %p59 = por %p57, %p58
      %p60 = scmp.ne.s32.totalorder %s52, %s54
      %p61 = scmp.eq.s32.totalorder %s23, 1
      %p62 = por %p60, %p61
      %p63 = scmp.ne.s32.totalorder %s54, %s55
      %p64 = scmp.eq.s32.totalorder %s23, 0
      %p65 = por %p63, %p64
      %p66 = scmp.ne.s32.totalorder %s54, %s55
      %p67 = scmp.eq.s32.totalorder %s24, 1
      %p68 = por %p66, %p67
      %p70 = scmp.ne.s32.totalorder %s55, %s69
      %p71 = scmp.eq.s32.totalorder %s24, 0
      %p72 = por %p70, %p71
      %s74 = sadd.s32 %s73, 1
      %p77 = scmp.eq.s32.totalorder %s18, 1
      %p78 = scmp.ne.s32.totalorder %s73, %s75
      %p79 = scmp.eq.s32.totalorder %s18, 0
      %p80 = por %p78, %p79
      %p81 = scmp.ne.s32.totalorder %s73, %s75
      %p82 = scmp.eq.s32.totalorder %s23, 1
      %p83 = por %p81, %p82
      %p84 = scmp.ne.s32.totalorder %s75, %s76
      %p85 = scmp.eq.s32.totalorder %s23, 0
      %p86 = por %p84, %p85
      %p87 = scmp.ne.s32.totalorder %s75, %s76
      %p88 = scmp.eq.s32.totalorder %s24, 1
      %p89 = por %p87, %p88
      %p91 = scmp.ne.s32.totalorder %s76, %s90
      %p92 = scmp.eq.s32.totalorder %s24, 0
      %p93 = por %p91, %p92
      %s95 = sadd.s32 %s94, 1
      %p98 = scmp.eq.s32.totalorder %s18, 1
      %p99 = scmp.ne.s32.totalorder %s94, %s96
      %p100 = scmp.eq.s32.totalorder %s18, 0
      %p101 = por %p99, %p100
      %p102 = scmp.ne.s32.totalorder %s94, %s96
      %p103 = scmp.eq.s32.totalorder %s23, 1
      %p104 = por %p102, %p103
      %p105 = scmp.ne.s32.totalorder %s96, %s97
      %p106 = scmp.eq.s32.totalorder %s23, 0
      %p107 = por %p105, %p106
      %p108 = scmp.ne.s32.totalorder %s96, %s97
      %p109 = scmp.eq.s32.totalorder %s24, 1
      %p110 = por %p108, %p109
      %p112 = scmp.ne.s32.totalorder %s97, %s111
      %p113 = scmp.eq.s32.totalorder %s24, 0
      %p114 = por %p112, %p113
      %s116 = sadd.s32 %s115, 1
      %p119 = scmp.eq.s32.totalorder %s18, 1
      %p120 = scmp.ne.s32.totalorder %s115, %s117
      %p121 = scmp.eq.s32.totalorder %s18, 0
      %p122 = por %p120, %p121
      %p123 = scmp.ne.s32.totalorder %s115, %s117
      %p124 = scmp.eq.s32.totalorder %s23, 1
      %p125 = por %p123, %p124
      %p126 = scmp.ne.s32.totalorder %s117, %s118
      %p127 = scmp.eq.s32.totalorder %s23, 0
      %p128 = por %p126, %p127
      %p129 = scmp.ne.s32.totalorder %s117, %s118
      %p130 = scmp.eq.s32.totalorder %s24, 1
      %p131 = por %p129, %p130
      %p133 = scmp.ne.s32.totalorder %s118, %s132
      %p134 = scmp.eq.s32.totalorder %s24, 0
      %p135 = por %p133, %p134
      %s136 = ssub.s32 %s18, %s25
      %p137 = scmp.eq.s32.totalorder %s136, 0
      %s139 = sadd.s32 %s138, 1
      %s140 = scalar_select %p137, %s138, %s139
      %p143 = pneg %p137
      %p144 = scmp.eq.s32.totalorder %s18, 1
      %p145 = por %p143, %p144
      %p146 = scmp.ne.s32.totalorder %s138, %s141
      %p147 = scmp.eq.s32.totalorder %s18, 0
      %p148 = por %p146, %p147
      %p149 = scmp.ne.s32.totalorder %s138, %s141
      %p150 = scmp.eq.s32.totalorder %s23, 1
      %p151 = por %p149, %p150
      %p152 = scmp.ne.s32.totalorder %s141, %s142
      %p153 = scmp.eq.s32.totalorder %s23, 0
      %p154 = por %p152, %p153
      %p155 = scmp.ne.s32.totalorder %s141, %s142
      %p156 = scmp.eq.s32.totalorder %s24, 1
      %p157 = por %p155, %p156
      %p159 = scmp.ne.s32.totalorder %s142, %s158
      %p160 = scmp.eq.s32.totalorder %s24, 0
      %p161 = por %p159, %p160
      %p162 = scmp.le.s32.totalorder 1, %s18
      %p163 = scmp.lt.s32.totalorder %s18, 3
      %p164 = pnand %p162, %p163
      %p165 = pneg %p164
      // Predicated region
      $region9: #{tpu_custom_call.1} parent=5 // pred_check
        _
      $region10: #{tpu_custom_call.1} parent=5 // pred_check_branch
        %167 = sbr.rel (%p164) target = $region12
      $region11: #{tpu_custom_call.1} parent=5 // pred_region
        %s168 = ssub.s32 %s18, 1
        // Predicated region
        $region13: #{tpu_custom_call.1} parent=11 // pred_check
          %p169 = pneg %p65
        $region14: #{tpu_custom_call.1} parent=11 // pred_check_branch
          %171 = sbr.rel (%p169) target = $region16
        $region15: #{tpu_custom_call.1} parent=11 // pred_region
          %s173 = ssub.s32 4096, 4096
          %174 = vsyncadd [#allocation6], %s173
          %s175 = sshll.u32 [#allocation5], 4
          %s176 = int_to_ptr.vmem [resolvable:$true] %s175
          %181 = dma.hbm_to_vmem [thread:$0]  %s1, 4096, %s176, [#allocation6], 128, 128, 8
        $region16: #{tpu_custom_call.1} parent=11 // pred_fallthru
          _
        // Predicated region
        $region17: #{tpu_custom_call.1} parent=11 // pred_check
          %p182 = pneg %p86
        $region18: #{tpu_custom_call.1} parent=11 // pred_check_branch
          %184 = sbr.rel (%p182) target = $region20
        $region19: #{tpu_custom_call.1} parent=11 // pred_region
          _
        $region20: #{tpu_custom_call.1} parent=11 // pred_fallthru
          _
        // Predicated region
        $region21: #{tpu_custom_call.1} parent=11 // pred_check
          %p185 = pneg %p107
        $region22: #{tpu_custom_call.1} parent=11 // pred_check_branch
          %187 = sbr.rel (%p185) target = $region24
        $region23: #{tpu_custom_call.1} parent=11 // pred_region
          %s189 = ssub.s32 4096, 4096
          %190 = vsyncadd [#allocation6], %s189
          %s191 = sshll.u32 [#allocation7], 4
          %s192 = int_to_ptr.vmem [resolvable:$true] %s191
          %197 = dma.hbm_to_vmem [thread:$0]  %s3, 4096, %s192, [#allocation6], 128, 128, 8
        $region24: #{tpu_custom_call.1} parent=11 // pred_fallthru
          _
        // Predicated region
        $region25: #{tpu_custom_call.1} parent=11 // pred_check
          %p198 = pneg %p128
        $region26: #{tpu_custom_call.1} parent=11 // pred_check_branch
          %200 = sbr.rel (%p198) target = $region28
        $region27: #{tpu_custom_call.1} parent=11 // pred_region
          _
        $region28: #{tpu_custom_call.1} parent=11 // pred_fallthru
          _
      $region12: #{tpu_custom_call.1} parent=5 // pred_fallthru
        _
      %p201 = scmp.lt.s32.totalorder %s18, 2
      // Predicated region
      $region29: #{tpu_custom_call.1} parent=5 // pred_check
        %p202 = pneg %p201
      $region30: #{tpu_custom_call.1} parent=5 // pred_check_branch
        %204 = sbr.rel (%p202) target = $region32
      $region31: #{tpu_custom_call.1} parent=5 // pred_region
        // Predicated region
        $region33: #{tpu_custom_call.1} parent=31 // pred_check
          %p205 = pneg %p38
        $region34: #{tpu_custom_call.1} parent=31 // pred_check_branch
          %207 = sbr.rel (%p205) target = $region36
        $region35: #{tpu_custom_call.1} parent=31 // pred_region
          %s208 = sand.u32 %s28, 1
          %s209 = scalar_lea.sflag [#allocation3], %s208
          %s210 = sand.u32 %s28, 1
          %s211 = smul.addr %s210, 256
          %s212 = scalar_lea.vmem [#allocation2], %s211
          %s213 = smul.u32 32, %s18
          %s215 = ssub.s32 4096, 4096
          %216 = vsyncadd %s209, %s215
          %s217 = smul.addr %s213, 2
          %s218 = smul.addr %s217, 64
          %s219 = scalar_lea.hbm %s0, %s218
          %s220 = sshll.u32 %s212, 4
          %s221 = int_to_ptr.vmem [resolvable:$true] %s220
          %226 = dma.hbm_to_vmem [thread:$0]  %s219, 4096, %s221, %s209, 128, 128, 8
        $region36: #{tpu_custom_call.1} parent=31 // pred_fallthru
          _
      $region32: #{tpu_custom_call.1} parent=5 // pred_fallthru
        _
      %p227 = scmp.le.s32.totalorder 1, %s18
      %p228 = scmp.lt.s32.totalorder %s18, 3
      %p229 = pnand %p227, %p228
      %p230 = pneg %p229
      // Predicated region
      $region37: #{tpu_custom_call.1} parent=5 // pred_check
        _
      $region38: #{tpu_custom_call.1} parent=5 // pred_check_branch
        %232 = sbr.rel (%p229) target = $region40
      $region39: #{tpu_custom_call.1} parent=5 // pred_region
        %s233 = ssub.s32 %s18, 1
        %s234 = sand.u32 %s31, 1
        %s235 = scalar_lea.sflag [#allocation3], %s234
        %s236 = sand.u32 %s31, 1
        %s237 = smul.addr %s236, 256
        %s238 = scalar_lea.vmem [#allocation2], %s237
        // Predicated region
        $region41: #{tpu_custom_call.1} parent=39 // pred_check
          %p239 = pneg %p44
        $region42: #{tpu_custom_call.1} parent=39 // pred_check_branch
          %241 = sbr.rel (%p239) target = $region44
        $region43: #{tpu_custom_call.1} parent=39 // pred_region
          %242 = dma.done %s235, 4096
        $region44: #{tpu_custom_call.1} parent=39 // pred_fallthru
          _
        // Predicated region
        $region45: #{tpu_custom_call.1} parent=39 // pred_check
          %p243 = pneg %p65
        $region46: #{tpu_custom_call.1} parent=39 // pred_check_branch
          %245 = sbr.rel (%p243) target = $region48
        $region47: #{tpu_custom_call.1} parent=39 // pred_region
          %246 = dma.done [#allocation6], 4096
        $region48: #{tpu_custom_call.1} parent=39 // pred_fallthru
          _
        // Predicated region
        $region49: #{tpu_custom_call.1} parent=39 // pred_check
          %p247 = pneg %p107
        $region50: #{tpu_custom_call.1} parent=39 // pred_check_branch
          %249 = sbr.rel (%p247) target = $region52
        $region51: #{tpu_custom_call.1} parent=39 // pred_region
          %250 = dma.done [#allocation6], 4096
        $region52: #{tpu_custom_call.1} parent=39 // pred_fallthru
          _
        %s251 = sand.u32 %s31, 1
        %s252 = scalar_lea.sflag [#allocation3], %s251
        %s253 = sand.u32 %s31, 1
        %s254 = smul.addr %s253, 256
        %s255 = scalar_lea.vmem [#allocation2], %s254
        %p256 = pneg %p44
        %p257 = pneg %p41
        %p258 = pneg %p65
        %p259 = pneg %p62
        %p260 = pneg %p86
        %p261 = pneg %p83
        %p262 = pneg %p107
        %p263 = pneg %p104
        %p264 = pneg %p128
        %p265 = pneg %p125
        %p266 = pneg %p154
        %p267 = pneg %p151
        %s268 = sand.u32 %s141, 1
        %s269 = scalar_lea.sflag [#allocation4], %s268
        %s270 = sand.u32 %s141, 1
        %s271 = smul.addr %s270, 512
        %s272 = scalar_lea.vmem [#allocation8], %s271
        %s273 = smul.u32 32, %s23
        %s274 = smul.u32 32, %s23
        %v275 = vld [vmem:[%s238] sm:$0xff]
        %v276 = vld [vmem:[%s238 + $0x8] sm:$0xff]
        %v277 = vld [vmem:[%s238 + $0x10] sm:$0xff]
        %v278 = vld [vmem:[%s238 + $0x18] sm:$0xff]
        %v279 = vld [vmem:[%s238 + $0x20] sm:$0xff]
        %v280 = vld [vmem:[%s238 + $0x28] sm:$0xff]
        %v281 = vld [vmem:[%s238 + $0x30] sm:$0xff]
        %v282 = vld [vmem:[%s238 + $0x38] sm:$0xff]
        %v283 = vld [vmem:[%s238 + $0x40] sm:$0xff]
        %v284 = vld [vmem:[%s238 + $0x48] sm:$0xff]
        %v285 = vld [vmem:[%s238 + $0x50] sm:$0xff]
        %v286 = vld [vmem:[%s238 + $0x58] sm:$0xff]
        %v287 = vld [vmem:[%s238 + $0x60] sm:$0xff]
        %v288 = vld [vmem:[%s238 + $0x68] sm:$0xff]
        %v289 = vld [vmem:[%s238 + $0x70] sm:$0xff]
        %v290 = vld [vmem:[%s238 + $0x78] sm:$0xff]
        %v291 = vld [vmem:[%s238 + $0x80] sm:$0xff]
        %v292 = vld [vmem:[%s238 + $0x88] sm:$0xff]
        %v293 = vld [vmem:[%s238 + $0x90] sm:$0xff]
        %v294 = vld [vmem:[%s238 + $0x98] sm:$0xff]
        %v295 = vld [vmem:[%s238 + $0xa0] sm:$0xff]
        %v296 = vld [vmem:[%s238 + $0xa8] sm:$0xff]
        %v297 = vld [vmem:[%s238 + $0xb0] sm:$0xff]
        %v298 = vld [vmem:[%s238 + $0xb8] sm:$0xff]
        %v299 = vld [vmem:[%s238 + $0xc0] sm:$0xff]
        %v300 = vld [vmem:[%s238 + $0xc8] sm:$0xff]
        %v301 = vld [vmem:[%s238 + $0xd0] sm:$0xff]
        %v302 = vld [vmem:[%s238 + $0xd8] sm:$0xff]
        %v303 = vld [vmem:[%s238 + $0xe0] sm:$0xff]
        %v304 = vld [vmem:[%s238 + $0xe8] sm:$0xff]
        %v305 = vld [vmem:[%s238 + $0xf0] sm:$0xff]
        %v306 = vld [vmem:[%s238 + $0xf8] sm:$0xff]
        %v307 = vld [vmem:[#allocation5] sm:$0xff]
        %v308 = vld [vmem:[#allocation5 + $0x8] sm:$0xff]
        %v309 = vld [vmem:[#allocation5 + $0x10] sm:$0xff]
        %v310 = vld [vmem:[#allocation5 + $0x18] sm:$0xff]
        %v311 = vld [vmem:[#allocation5 + $0x20] sm:$0xff]
        %v312 = vld [vmem:[#allocation5 + $0x28] sm:$0xff]
        %v313 = vld [vmem:[#allocation5 + $0x30] sm:$0xff]
        %v314 = vld [vmem:[#allocation5 + $0x38] sm:$0xff]
        %v315 = vld [vmem:[#allocation5 + $0x40] sm:$0xff]
        %v316 = vld [vmem:[#allocation5 + $0x48] sm:$0xff]
        %v317 = vld [vmem:[#allocation5 + $0x50] sm:$0xff]
        %v318 = vld [vmem:[#allocation5 + $0x58] sm:$0xff]
        %v319 = vld [vmem:[#allocation5 + $0x60] sm:$0xff]
        %v320 = vld [vmem:[#allocation5 + $0x68] sm:$0xff]
        %v321 = vld [vmem:[#allocation5 + $0x70] sm:$0xff]
        %v322 = vld [vmem:[#allocation5 + $0x78] sm:$0xff]
        %v323 = vld [vmem:[#allocation5 + $0x80] sm:$0xff]
        %v324 = vld [vmem:[#allocation5 + $0x88] sm:$0xff]
        %v325 = vld [vmem:[#allocation5 + $0x90] sm:$0xff]
        %v326 = vld [vmem:[#allocation5 + $0x98] sm:$0xff]
        %v327 = vld [vmem:[#allocation5 + $0xa0] sm:$0xff]
        %v328 = vld [vmem:[#allocation5 + $0xa8] sm:$0xff]
        %v329 = vld [vmem:[#allocation5 + $0xb0] sm:$0xff]
        %v330 = vld [vmem:[#allocation5 + $0xb8] sm:$0xff]
        %v331 = vld [vmem:[#allocation5 + $0xc0] sm:$0xff]
        %v332 = vld [vmem:[#allocation5 + $0xc8] sm:$0xff]
        %v333 = vld [vmem:[#allocation5 + $0xd0] sm:$0xff]
        %v334 = vld [vmem:[#allocation5 + $0xd8] sm:$0xff]
        %v335 = vld [vmem:[#allocation5 + $0xe0] sm:$0xff]
        %v336 = vld [vmem:[#allocation5 + $0xe8] sm:$0xff]
        %v337 = vld [vmem:[#allocation5 + $0xf0] sm:$0xff]
        %v338 = vld [vmem:[#allocation5 + $0xf8] sm:$0xff]
        %v339 = vld [vmem:[%s2] sm:$0x3]
        %v341 = vlaneseq
        %v342 = vshrl.u32 %v341, 7
        %v343 = vsub.s32 0, %v342
        %v344 = vrot.slane %v339, %v343
        %v345 = vlaneseq
        %v346 = vshrl.u32 %v345, 7
        %v347 = vsub.s32 1, %v346
        %v348 = vrot.slane %v339, %v347
        %v383 = vunpack.c.l.b16 %v275
        %v384 = vunpack.c.h.b16 %v275
        %v385 = vunpack.c.l.b16 %v276
        %v386 = vunpack.c.h.b16 %v276
        %v387 = vunpack.c.l.b16 %v277
        %v388 = vunpack.c.h.b16 %v277
        %v389 = vunpack.c.l.b16 %v278
        %v390 = vunpack.c.h.b16 %v278
        %v391 = vunpack.c.l.b16 %v279
        %v392 = vunpack.c.h.b16 %v279
        %v393 = vunpack.c.l.b16 %v280
        %v394 = vunpack.c.h.b16 %v280
        %v395 = vunpack.c.l.b16 %v281
        %v396 = vunpack.c.h.b16 %v281
        %v397 = vunpack.c.l.b16 %v282
        %v398 = vunpack.c.h.b16 %v282
        %v399 = vunpack.c.l.b16 %v283
        %v400 = vunpack.c.h.b16 %v283
        %v401 = vunpack.c.l.b16 %v284
        %v402 = vunpack.c.h.b16 %v284
        %v403 = vunpack.c.l.b16 %v285
        %v404 = vunpack.c.h.b16 %v285
        %v405 = vunpack.c.l.b16 %v286
        %v406 = vunpack.c.h.b16 %v286
        %v407 = vunpack.c.l.b16 %v287
        %v408 = vunpack.c.h.b16 %v287
        %v409 = vunpack.c.l.b16 %v288
        %v410 = vunpack.c.h.b16 %v288
        %v411 = vunpack.c.l.b16 %v289
        %v412 = vunpack.c.h.b16 %v289
        %v413 = vunpack.c.l.b16 %v290
        %v414 = vunpack.c.h.b16 %v290
        %v415 = vunpack.c.l.b16 %v291
        %v416 = vunpack.c.h.b16 %v291
        %v417 = vunpack.c.l.b16 %v292
        %v418 = vunpack.c.h.b16 %v292
        %v419 = vunpack.c.l.b16 %v293
        %v420 = vunpack.c.h.b16 %v293
        %v421 = vunpack.c.l.b16 %v294
        %v422 = vunpack.c.h.b16 %v294
        %v423 = vunpack.c.l.b16 %v295
        %v424 = vunpack.c.h.b16 %v295
        %v425 = vunpack.c.l.b16 %v296
        %v426 = vunpack.c.h.b16 %v296
        %v427 = vunpack.c.l.b16 %v297
        %v428 = vunpack.c.h.b16 %v297
        %v429 = vunpack.c.l.b16 %v298
        %v430 = vunpack.c.h.b16 %v298
        %v431 = vunpack.c.l.b16 %v299
        %v432 = vunpack.c.h.b16 %v299
        %v433 = vunpack.c.l.b16 %v300
        %v434 = vunpack.c.h.b16 %v300
        %v435 = vunpack.c.l.b16 %v301
        %v436 = vunpack.c.h.b16 %v301
        %v437 = vunpack.c.l.b16 %v302
        %v438 = vunpack.c.h.b16 %v302
        %v439 = vunpack.c.l.b16 %v303
        %v440 = vunpack.c.h.b16 %v303
        %v441 = vunpack.c.l.b16 %v304
        %v442 = vunpack.c.h.b16 %v304
        %v443 = vunpack.c.l.b16 %v305
        %v444 = vunpack.c.h.b16 %v305
        %v445 = vunpack.c.l.b16 %v306
        %v446 = vunpack.c.h.b16 %v306
        %v447 = vpack.c.b16 %v385, %v383
        %v448 = vpack.c.b16 %v386, %v384
        %v449 = vpack.c.b16 %v389, %v387
        %v450 = vpack.c.b16 %v390, %v388
        %v451 = vpack.c.b16 %v393, %v391
        %v452 = vpack.c.b16 %v394, %v392
        %v453 = vpack.c.b16 %v397, %v395
        %v454 = vpack.c.b16 %v398, %v396
        %v455 = vpack.c.b16 %v401, %v399
        %v456 = vpack.c.b16 %v402, %v400
        %v457 = vpack.c.b16 %v405, %v403
        %v458 = vpack.c.b16 %v406, %v404
        %v459 = vpack.c.b16 %v409, %v407
        %v460 = vpack.c.b16 %v410, %v408
        %v461 = vpack.c.b16 %v413, %v411
        %v462 = vpack.c.b16 %v414, %v412
        %v463 = vpack.c.b16 %v417, %v415
        %v464 = vpack.c.b16 %v418, %v416
        %v465 = vpack.c.b16 %v421, %v419
        %v466 = vpack.c.b16 %v422, %v420
        %v467 = vpack.c.b16 %v425, %v423
        %v468 = vpack.c.b16 %v426, %v424
        %v469 = vpack.c.b16 %v429, %v427
        %v470 = vpack.c.b16 %v430, %v428
        %v471 = vpack.c.b16 %v433, %v431
        %v472 = vpack.c.b16 %v434, %v432
        %v473 = vpack.c.b16 %v437, %v435
        %v474 = vpack.c.b16 %v438, %v436
        %v475 = vpack.c.b16 %v441, %v439
        %v476 = vpack.c.b16 %v442, %v440
        %v477 = vpack.c.b16 %v445, %v443
        %v478 = vpack.c.b16 %v446, %v444
        %v543 = vunpack.c.l.b16 %v307
        %v544 = vunpack.c.h.b16 %v307
        %v545 = vunpack.c.l.b16 %v308
        %v546 = vunpack.c.h.b16 %v308
        %v547 = vunpack.c.l.b16 %v309
        %v548 = vunpack.c.h.b16 %v309
        %v549 = vunpack.c.l.b16 %v310
        %v550 = vunpack.c.h.b16 %v310
        %v551 = vunpack.c.l.b16 %v311
        %v552 = vunpack.c.h.b16 %v311
        %v553 = vunpack.c.l.b16 %v312
        %v554 = vunpack.c.h.b16 %v312
        %v555 = vunpack.c.l.b16 %v313
        %v556 = vunpack.c.h.b16 %v313
        %v557 = vunpack.c.l.b16 %v314
        %v558 = vunpack.c.h.b16 %v314
        %v559 = vunpack.c.l.b16 %v315
        %v560 = vunpack.c.h.b16 %v315
        %v561 = vunpack.c.l.b16 %v316
        %v562 = vunpack.c.h.b16 %v316
        %v563 = vunpack.c.l.b16 %v317
        %v564 = vunpack.c.h.b16 %v317
        %v565 = vunpack.c.l.b16 %v318
        %v566 = vunpack.c.h.b16 %v318
        %v567 = vunpack.c.l.b16 %v319
        %v568 = vunpack.c.h.b16 %v319
        %v569 = vunpack.c.l.b16 %v320
        %v570 = vunpack.c.h.b16 %v320
        %v571 = vunpack.c.l.b16 %v321
        %v572 = vunpack.c.h.b16 %v321
        %v573 = vunpack.c.l.b16 %v322
        %v574 = vunpack.c.h.b16 %v322
        %v575 = vunpack.c.l.b16 %v323
        %v576 = vunpack.c.h.b16 %v323
        %v577 = vunpack.c.l.b16 %v324
        %v578 = vunpack.c.h.b16 %v324
        %v579 = vunpack.c.l.b16 %v325
        %v580 = vunpack.c.h.b16 %v325
        %v581 = vunpack.c.l.b16 %v326
        %v582 = vunpack.c.h.b16 %v326
        %v583 = vunpack.c.l.b16 %v327
        %v584 = vunpack.c.h.b16 %v327
        %v585 = vunpack.c.l.b16 %v328
        %v586 = vunpack.c.h.b16 %v328
        %v587 = vunpack.c.l.b16 %v329
        %v588 = vunpack.c.h.b16 %v329
        %v589 = vunpack.c.l.b16 %v330
        %v590 = vunpack.c.h.b16 %v330
        %v591 = vunpack.c.l.b16 %v331
        %v592 = vunpack.c.h.b16 %v331
        %v593 = vunpack.c.l.b16 %v332
        %v594 = vunpack.c.h.b16 %v332
        %v595 = vunpack.c.l.b16 %v333
        %v596 = vunpack.c.h.b16 %v333
        %v597 = vunpack.c.l.b16 %v334
        %v598 = vunpack.c.h.b16 %v334
        %v599 = vunpack.c.l.b16 %v335
        %v600 = vunpack.c.h.b16 %v335
        %v601 = vunpack.c.l.b16 %v336
        %v602 = vunpack.c.h.b16 %v336
        %v603 = vunpack.c.l.b16 %v337
        %v604 = vunpack.c.h.b16 %v337
        %v605 = vunpack.c.l.b16 %v338
        %v606 = vunpack.c.h.b16 %v338
        %v607 = vpack.c.b16 %v545, %v543
        %v608 = vpack.c.b16 %v546, %v544
        %v609 = vpack.c.b16 %v549, %v547
        %v610 = vpack.c.b16 %v550, %v548
        %v611 = vpack.c.b16 %v553, %v551
        %v612 = vpack.c.b16 %v554, %v552
        %v613 = vpack.c.b16 %v557, %v555
        %v614 = vpack.c.b16 %v558, %v556
        %v615 = vpack.c.b16 %v561, %v559
        %v616 = vpack.c.b16 %v562, %v560
        %v617 = vpack.c.b16 %v565, %v563
        %v618 = vpack.c.b16 %v566, %v564
        %v619 = vpack.c.b16 %v569, %v567
        %v620 = vpack.c.b16 %v570, %v568
        %v621 = vpack.c.b16 %v573, %v571
        %v622 = vpack.c.b16 %v574, %v572
        %v623 = vpack.c.b16 %v577, %v575
        %v624 = vpack.c.b16 %v578, %v576
        %v625 = vpack.c.b16 %v581, %v579
        %v626 = vpack.c.b16 %v582, %v580
        %v627 = vpack.c.b16 %v585, %v583
        %v628 = vpack.c.b16 %v586, %v584
        %v629 = vpack.c.b16 %v589, %v587
        %v630 = vpack.c.b16 %v590, %v588
        %v631 = vpack.c.b16 %v593, %v591
        %v632 = vpack.c.b16 %v594, %v592
        %v633 = vpack.c.b16 %v597, %v595
        %v634 = vpack.c.b16 %v598, %v596
        %v635 = vpack.c.b16 %v601, %v599
        %v636 = vpack.c.b16 %v602, %v600
        %v637 = vpack.c.b16 %v605, %v603
        %v638 = vpack.c.b16 %v606, %v604
        %671 = vmatprep.subr.bf16.mxu0 %v608
        %672 = vmatpush1.bf16.msra.mxu0 %v607
        %673 = vmatprep.subr.bf16.mxu0 %v610
        %674 = vmatpush1.bf16.msra.mxu0 %v609
        %675 = vmatprep.subr.bf16.mxu0 %v612
        %676 = vmatpush1.bf16.msra.mxu0 %v611
        %677 = vmatprep.subr.bf16.mxu0 %v614
        %678 = vmatpush1.bf16.msra.mxu0 %v613
        %679 = vmatprep.subr.bf16.mxu0 %v616
        %680 = vmatpush1.bf16.msra.mxu0 %v615
        %681 = vmatprep.subr.bf16.mxu0 %v618
        %682 = vmatpush1.bf16.msra.mxu0 %v617
        %683 = vmatprep.subr.bf16.mxu0 %v620
        %684 = vmatpush1.bf16.msra.mxu0 %v619
        %685 = vmatprep.subr.bf16.mxu0 %v622
        %686 = vmatpush1.bf16.msra.mxu0 %v621
        %687 = vmatprep.subr.bf16.mxu0 %v624
        %688 = vmatpush1.bf16.msra.mxu0 %v623
        %689 = vmatprep.subr.bf16.mxu0 %v626
        %690 = vmatpush1.bf16.msra.mxu0 %v625
        %691 = vmatprep.subr.bf16.mxu0 %v628
        %692 = vmatpush1.bf16.msra.mxu0 %v627
        %693 = vmatprep.subr.bf16.mxu0 %v630
        %694 = vmatpush1.bf16.msra.mxu0 %v629
        %695 = vmatprep.subr.bf16.mxu0 %v632
        %696 = vmatpush1.bf16.msra.mxu0 %v631
        %697 = vmatprep.subr.bf16.mxu0 %v634
        %698 = vmatpush1.bf16.msra.mxu0 %v633
        %699 = vmatprep.subr.bf16.mxu0 %v636
        %700 = vmatpush1.bf16.msra.mxu0 %v635
        %701 = vmatprep.subr.bf16.mxu0 %v638
        %702 = vmatpush1.bf16.msra.mxu0 %v637
        %703 = vmatprep.mubr.bf16.mxu0 %v448
        %704 = vmatmul.mubr.bf16.gmra.mrb[0].mxu0 %v447
        %v705 = vpop.f32.mrb[0].mxu0
        %v706 = vadd.f32 %v344, %v705
        %v707 = vpop.f32.mrb[0].mxu0
        %v708 = vadd.f32 %v348, %v707
        %v709 = vpop.f32.mrb[0].mxu0
        %v710 = vadd.f32 %v344, %v709
        %v711 = vpop.f32.mrb[0].mxu0
        %v712 = vadd.f32 %v348, %v711
        %713 = vmatprep.mubr.bf16.mxu0 %v450
        %714 = vmatmul.mubr.bf16.gmra.mrb[0].mxu0 %v449
        %v715 = vpop.f32.mrb[0].mxu0
        %v716 = vadd.f32 %v344, %v715
        %v717 = vpop.f32.mrb[0].mxu0
        %v718 = vadd.f32 %v348, %v717
        %v719 = vpop.f32.mrb[0].mxu0
        %v720 = vadd.f32 %v344, %v719
        %v721 = vpop.f32.mrb[0].mxu0
        %v722 = vadd.f32 %v348, %v721
        %723 = vmatprep.mubr.bf16.mxu0 %v452
        %724 = vmatmul.mubr.bf16.gmra.mrb[0].mxu0 %v451
        %v725 = vpop.f32.mrb[0].mxu0
        %v726 = vadd.f32 %v344, %v725
        %v727 = vpop.f32.mrb[0].mxu0
        %v728 = vadd.f32 %v348, %v727
        %v729 = vpop.f32.mrb[0].mxu0
        %v730 = vadd.f32 %v344, %v729
        %v731 = vpop.f32.mrb[0].mxu0
        %v732 = vadd.f32 %v348, %v731
        %733 = vmatprep.mubr.bf16.mxu0 %v454
        %734 = vmatmul.mubr.bf16.gmra.mrb[0].mxu0 %v453
        %v735 = vpop.f32.mrb[0].mxu0
        %v736 = vadd.f32 %v344, %v735
        %v737 = vpop.f32.mrb[0].mxu0
        %v738 = vadd.f32 %v348, %v737
        %v739 = vpop.f32.mrb[0].mxu0
        %v740 = vadd.f32 %v344, %v739
        %v741 = vpop.f32.mrb[0].mxu0
        %v742 = vadd.f32 %v348, %v741
        %743 = vmatprep.mubr.bf16.mxu0 %v456
        %744 = vmatmul.mubr.bf16.gmra.mrb[0].mxu0 %v455
        %v745 = vpop.f32.mrb[0].mxu0
        %v746 = vadd.f32 %v344, %v745
        %v747 = vpop.f32.mrb[0].mxu0
        %v748 = vadd.f32 %v348, %v747
        %v749 = vpop.f32.mrb[0].mxu0
        %v750 = vadd.f32 %v344, %v749
        %v751 = vpop.f32.mrb[0].mxu0
        %v752 = vadd.f32 %v348, %v751
        %753 = vmatprep.mubr.bf16.mxu0 %v458
        %754 = vmatmul.mubr.bf16.gmra.mrb[0].mxu0 %v457
        %v755 = vpop.f32.mrb[0].mxu0
        %v756 = vadd.f32 %v344, %v755
        %v757 = vpop.f32.mrb[0].mxu0
        %v758 = vadd.f32 %v348, %v757
        %v759 = vpop.f32.mrb[0].mxu0
        %v760 = vadd.f32 %v344, %v759
        %v761 = vpop.f32.mrb[0].mxu0
        %v762 = vadd.f32 %v348, %v761
        %763 = vmatprep.mubr.bf16.mxu0 %v460
        %764 = vmatmul.mubr.bf16.gmra.mrb[0].mxu0 %v459
        %v765 = vpop.f32.mrb[0].mxu0
        %v766 = vadd.f32 %v344, %v765
        %v767 = vpop.f32.mrb[0].mxu0
        %v768 = vadd.f32 %v348, %v767
        %v769 = vpop.f32.mrb[0].mxu0
        %v770 = vadd.f32 %v344, %v769
        %v771 = vpop.f32.mrb[0].mxu0
        %v772 = vadd.f32 %v348, %v771
        %773 = vmatprep.mubr.bf16.mxu0 %v462
        %774 = vmatmul.mubr.bf16.gmra.mrb[0].mxu0 %v461
        %v775 = vpop.f32.mrb[0].mxu0
        %v776 = vadd.f32 %v344, %v775
        %v777 = vpop.f32.mrb[0].mxu0
        %v778 = vadd.f32 %v348, %v777
        %v779 = vpop.f32.mrb[0].mxu0
        %v780 = vadd.f32 %v344, %v779
        %v781 = vpop.f32.mrb[0].mxu0
        %v782 = vadd.f32 %v348, %v781
        %783 = vmatprep.mubr.bf16.mxu0 %v464
        %784 = vmatmul.mubr.bf16.gmra.mrb[0].mxu0 %v463
        %v785 = vpop.f32.mrb[0].mxu0
        %v786 = vadd.f32 %v344, %v785
        %v787 = vpop.f32.mrb[0].mxu0
        %v788 = vadd.f32 %v348, %v787
        %v789 = vpop.f32.mrb[0].mxu0
        %v790 = vadd.f32 %v344, %v789
        %v791 = vpop.f32.mrb[0].mxu0
        %v792 = vadd.f32 %v348, %v791
        %793 = vmatprep.mubr.bf16.mxu0 %v466
        %794 = vmatmul.mubr.bf16.gmra.mrb[0].mxu0 %v465
        %v795 = vpop.f32.mrb[0].mxu0
        %v796 = vadd.f32 %v344, %v795
        %v797 = vpop.f32.mrb[0].mxu0
        %v798 = vadd.f32 %v348, %v797
        %v799 = vpop.f32.mrb[0].mxu0
        %v800 = vadd.f32 %v344, %v799
        %v801 = vpop.f32.mrb[0].mxu0
        %v802 = vadd.f32 %v348, %v801
        %803 = vmatprep.mubr.bf16.mxu0 %v468
        %804 = vmatmul.mubr.bf16.gmra.mrb[0].mxu0 %v467
        %v805 = vpop.f32.mrb[0].mxu0
        %v806 = vadd.f32 %v344, %v805
        %v807 = vpop.f32.mrb[0].mxu0
        %v808 = vadd.f32 %v348, %v807
        %v809 = vpop.f32.mrb[0].mxu0
        %v810 = vadd.f32 %v344, %v809
        %v811 = vpop.f32.mrb[0].mxu0
        %v812 = vadd.f32 %v348, %v811
        %813 = vmatprep.mubr.bf16.mxu0 %v470
        %814 = vmatmul.mubr.bf16.gmra.mrb[0].mxu0 %v469
        %v815 = vpop.f32.mrb[0].mxu0
        %v816 = vadd.f32 %v344, %v815
        %v817 = vpop.f32.mrb[0].mxu0
        %v818 = vadd.f32 %v348, %v817
        %v819 = vpop.f32.mrb[0].mxu0
        %v820 = vadd.f32 %v344, %v819
        %v821 = vpop.f32.mrb[0].mxu0
        %v822 = vadd.f32 %v348, %v821
        %823 = vmatprep.mubr.bf16.mxu0 %v472
        %824 = vmatmul.mubr.bf16.gmra.mrb[0].mxu0 %v471
        %v825 = vpop.f32.mrb[0].mxu0
        %v826 = vadd.f32 %v344, %v825
        %v827 = vpop.f32.mrb[0].mxu0
        %v828 = vadd.f32 %v348, %v827
        %v829 = vpop.f32.mrb[0].mxu0
        %v830 = vadd.f32 %v344, %v829
        %v831 = vpop.f32.mrb[0].mxu0
        %v832 = vadd.f32 %v348, %v831
        %833 = vmatprep.mubr.bf16.mxu0 %v474
        %834 = vmatmul.mubr.bf16.gmra.mrb[0].mxu0 %v473
        %v835 = vpop.f32.mrb[0].mxu0
        %v836 = vadd.f32 %v344, %v835
        %v837 = vpop.f32.mrb[0].mxu0
        %v838 = vadd.f32 %v348, %v837
        %v839 = vpop.f32.mrb[0].mxu0
        %v840 = vadd.f32 %v344, %v839
        %v841 = vpop.f32.mrb[0].mxu0
        %v842 = vadd.f32 %v348, %v841
        %843 = vmatprep.mubr.bf16.mxu0 %v476
        %844 = vmatmul.mubr.bf16.gmra.mrb[0].mxu0 %v475
        %v845 = vpop.f32.mrb[0].mxu0
        %v846 = vadd.f32 %v344, %v845
        %v847 = vpop.f32.mrb[0].mxu0
        %v848 = vadd.f32 %v348, %v847
        %v849 = vpop.f32.mrb[0].mxu0
        %v850 = vadd.f32 %v344, %v849
        %v851 = vpop.f32.mrb[0].mxu0
        %v852 = vadd.f32 %v348, %v851
        %853 = vmatprep.mubr.bf16.mxu0 %v478
        %854 = vmatmul.mubr.bf16.gmra.mrb[0].mxu0 %v477
        %v855 = vpop.f32.mrb[0].mxu0
        %v856 = vadd.f32 %v344, %v855
        %v857 = vpop.f32.mrb[0].mxu0
        %v858 = vadd.f32 %v348, %v857
        %v859 = vpop.f32.mrb[0].mxu0
        %v860 = vadd.f32 %v344, %v859
        %v861 = vpop.f32.mrb[0].mxu0
        %v862 = vadd.f32 %v348, %v861
        %863 = vdwg.mxu0
        %v864 = vmax.f32 %v706, 0.0
        %v865 = vmax.f32 %v708, 0.0
        %v866 = vmax.f32 %v710, 0.0
        %v867 = vmax.f32 %v712, 0.0
        %v868 = vmax.f32 %v716, 0.0
        %v869 = vmax.f32 %v718, 0.0
        %v870 = vmax.f32 %v720, 0.0
        %v871 = vmax.f32 %v722, 0.0
        %v872 = vmax.f32 %v726, 0.0
        %v873 = vmax.f32 %v728, 0.0
        %v874 = vmax.f32 %v730, 0.0
        %v875 = vmax.f32 %v732, 0.0
        %v876 = vmax.f32 %v736, 0.0
        %v877 = vmax.f32 %v738, 0.0
        %v878 = vmax.f32 %v740, 0.0
        %v879 = vmax.f32 %v742, 0.0
        %v880 = vmax.f32 %v746, 0.0
        %v881 = vmax.f32 %v748, 0.0
        %v882 = vmax.f32 %v750, 0.0
        %v883 = vmax.f32 %v752, 0.0
        %v884 = vmax.f32 %v756, 0.0
        %v885 = vmax.f32 %v758, 0.0
        %v886 = vmax.f32 %v760, 0.0
        %v887 = vmax.f32 %v762, 0.0
        %v888 = vmax.f32 %v766, 0.0
        %v889 = vmax.f32 %v768, 0.0
        %v890 = vmax.f32 %v770, 0.0
        %v891 = vmax.f32 %v772, 0.0
        %v892 = vmax.f32 %v776, 0.0
        %v893 = vmax.f32 %v778, 0.0
        %v894 = vmax.f32 %v780, 0.0
        %v895 = vmax.f32 %v782, 0.0
        %v896 = vmax.f32 %v786, 0.0
        %v897 = vmax.f32 %v788, 0.0
        %v898 = vmax.f32 %v790, 0.0
        %v899 = vmax.f32 %v792, 0.0
        %v900 = vmax.f32 %v796, 0.0
        %v901 = vmax.f32 %v798, 0.0
        %v902 = vmax.f32 %v800, 0.0
        %v903 = vmax.f32 %v802, 0.0
        %v904 = vmax.f32 %v806, 0.0
        %v905 = vmax.f32 %v808, 0.0
        %v906 = vmax.f32 %v810, 0.0
        %v907 = vmax.f32 %v812, 0.0
        %v908 = vmax.f32 %v816, 0.0
        %v909 = vmax.f32 %v818, 0.0
        %v910 = vmax.f32 %v820, 0.0
        %v911 = vmax.f32 %v822, 0.0
        %v912 = vmax.f32 %v826, 0.0
        %v913 = vmax.f32 %v828, 0.0
        %v914 = vmax.f32 %v830, 0.0
        %v915 = vmax.f32 %v832, 0.0
        %v916 = vmax.f32 %v836, 0.0
        %v917 = vmax.f32 %v838, 0.0
        %v918 = vmax.f32 %v840, 0.0
        %v919 = vmax.f32 %v842, 0.0
        %v920 = vmax.f32 %v846, 0.0
        %v921 = vmax.f32 %v848, 0.0
        %v922 = vmax.f32 %v850, 0.0
        %v923 = vmax.f32 %v852, 0.0
        %v924 = vmax.f32 %v856, 0.0
        %v925 = vmax.f32 %v858, 0.0
        %v926 = vmax.f32 %v860, 0.0
        %v927 = vmax.f32 %v862, 0.0
        %v928 = vpack.c.bf16 %v866, %v864
        %v929 = vpack.c.bf16 %v867, %v865
        %v930 = vpack.c.bf16 %v870, %v868
        %v931 = vpack.c.bf16 %v871, %v869
        %v932 = vpack.c.bf16 %v874, %v872
        %v933 = vpack.c.bf16 %v875, %v873
        %v934 = vpack.c.bf16 %v878, %v876
        %v935 = vpack.c.bf16 %v879, %v877
        %v936 = vpack.c.bf16 %v882, %v880
        %v937 = vpack.c.bf16 %v883, %v881
        %v938 = vpack.c.bf16 %v886, %v884
        %v939 = vpack.c.bf16 %v887, %v885
        %v940 = vpack.c.bf16 %v890, %v888
        %v941 = vpack.c.bf16 %v891, %v889
        %v942 = vpack.c.bf16 %v894, %v892
        %v943 = vpack.c.bf16 %v895, %v893
        %v944 = vpack.c.bf16 %v898, %v896
        %v945 = vpack.c.bf16 %v899, %v897
        %v946 = vpack.c.bf16 %v902, %v900
        %v947 = vpack.c.bf16 %v903, %v901
        %v948 = vpack.c.bf16 %v906, %v904
        %v949 = vpack.c.bf16 %v907, %v905
        %v950 = vpack.c.bf16 %v910, %v908
        %v951 = vpack.c.bf16 %v911, %v909
        %v952 = vpack.c.bf16 %v914, %v912
        %v953 = vpack.c.bf16 %v915, %v913
        %v954 = vpack.c.bf16 %v918, %v916
        %v955 = vpack.c.bf16 %v919, %v917
        %v956 = vpack.c.bf16 %v922, %v920
        %v957 = vpack.c.bf16 %v923, %v921
        %v958 = vpack.c.bf16 %v926, %v924
        %v959 = vpack.c.bf16 %v927, %v925
        %v960 = vld [vmem:[#allocation7] sm:$0xff]
        %v961 = vld [vmem:[#allocation7 + $0x8] sm:$0xff]
        %v962 = vld [vmem:[#allocation7 + $0x10] sm:$0xff]
        %v963 = vld [vmem:[#allocation7 + $0x18] sm:$0xff]
        %v964 = vld [vmem:[#allocation7 + $0x20] sm:$0xff]
        %v965 = vld [vmem:[#allocation7 + $0x28] sm:$0xff]
        %v966 = vld [vmem:[#allocation7 + $0x30] sm:$0xff]
        %v967 = vld [vmem:[#allocation7 + $0x38] sm:$0xff]
        %v968 = vld [vmem:[#allocation7 + $0x40] sm:$0xff]
        %v969 = vld [vmem:[#allocation7 + $0x48] sm:$0xff]
        %v970 = vld [vmem:[#allocation7 + $0x50] sm:$0xff]
        %v971 = vld [vmem:[#allocation7 + $0x58] sm:$0xff]
        %v972 = vld [vmem:[#allocation7 + $0x60] sm:$0xff]
        %v973 = vld [vmem:[#allocation7 + $0x68] sm:$0xff]
        %v974 = vld [vmem:[#allocation7 + $0x70] sm:$0xff]
        %v975 = vld [vmem:[#allocation7 + $0x78] sm:$0xff]
        %v976 = vld [vmem:[#allocation7 + $0x80] sm:$0xff]
        %v977 = vld [vmem:[#allocation7 + $0x88] sm:$0xff]
        %v978 = vld [vmem:[#allocation7 + $0x90] sm:$0xff]
        %v979 = vld [vmem:[#allocation7 + $0x98] sm:$0xff]
        %v980 = vld [vmem:[#allocation7 + $0xa0] sm:$0xff]
        %v981 = vld [vmem:[#allocation7 + $0xa8] sm:$0xff]
        %v982 = vld [vmem:[#allocation7 + $0xb0] sm:$0xff]
        %v983 = vld [vmem:[#allocation7 + $0xb8] sm:$0xff]
        %v984 = vld [vmem:[#allocation7 + $0xc0] sm:$0xff]
        %v985 = vld [vmem:[#allocation7 + $0xc8] sm:$0xff]
        %v986 = vld [vmem:[#allocation7 + $0xd0] sm:$0xff]
        %v987 = vld [vmem:[#allocation7 + $0xd8] sm:$0xff]
        %v988 = vld [vmem:[#allocation7 + $0xe0] sm:$0xff]
        %v989 = vld [vmem:[#allocation7 + $0xe8] sm:$0xff]
        %v990 = vld [vmem:[#allocation7 + $0xf0] sm:$0xff]
        %v991 = vld [vmem:[#allocation7 + $0xf8] sm:$0xff]
        %v992 = vld [vmem:[%s4] sm:$0x3]
        %v994 = vlaneseq
        %v995 = vshrl.u32 %v994, 7
        %v996 = vsub.s32 0, %v995
        %v997 = vrot.slane %v992, %v996
        %v998 = vlaneseq
        %v999 = vshrl.u32 %v998, 7
        %v1000 = vsub.s32 1, %v999
        %v1001 = vrot.slane %v992, %v1000
        %v1036 = vunpack.c.l.b16 %v960
        %v1037 = vunpack.c.h.b16 %v960
        %v1038 = vunpack.c.l.b16 %v961
        %v1039 = vunpack.c.h.b16 %v961
        %v1040 = vunpack.c.l.b16 %v962
        %v1041 = vunpack.c.h.b16 %v962
        %v1042 = vunpack.c.l.b16 %v963
        %v1043 = vunpack.c.h.b16 %v963
        %v1044 = vunpack.c.l.b16 %v964
        %v1045 = vunpack.c.h.b16 %v964
        %v1046 = vunpack.c.l.b16 %v965
        %v1047 = vunpack.c.h.b16 %v965
        %v1048 = vunpack.c.l.b16 %v966
        %v1049 = vunpack.c.h.b16 %v966
        %v1050 = vunpack.c.l.b16 %v967
        %v1051 = vunpack.c.h.b16 %v967
        %v1052 = vunpack.c.l.b16 %v968
        %v1053 = vunpack.c.h.b16 %v968
        %v1054 = vunpack.c.l.b16 %v969
        %v1055 = vunpack.c.h.b16 %v969
        %v1056 = vunpack.c.l.b16 %v970
        %v1057 = vunpack.c.h.b16 %v970
        %v1058 = vunpack.c.l.b16 %v971
        %v1059 = vunpack.c.h.b16 %v971
        %v1060 = vunpack.c.l.b16 %v972
        %v1061 = vunpack.c.h.b16 %v972
        %v1062 = vunpack.c.l.b16 %v973
        %v1063 = vunpack.c.h.b16 %v973
        %v1064 = vunpack.c.l.b16 %v974
        %v1065 = vunpack.c.h.b16 %v974
        %v1066 = vunpack.c.l.b16 %v975
        %v1067 = vunpack.c.h.b16 %v975
        %v1068 = vunpack.c.l.b16 %v976
        %v1069 = vunpack.c.h.b16 %v976
        %v1070 = vunpack.c.l.b16 %v977
        %v1071 = vunpack.c.h.b16 %v977
        %v1072 = vunpack.c.l.b16 %v978
        %v1073 = vunpack.c.h.b16 %v978
        %v1074 = vunpack.c.l.b16 %v979
        %v1075 = vunpack.c.h.b16 %v979
        %v1076 = vunpack.c.l.b16 %v980
        %v1077 = vunpack.c.h.b16 %v980
        %v1078 = vunpack.c.l.b16 %v981
        %v1079 = vunpack.c.h.b16 %v981
        %v1080 = vunpack.c.l.b16 %v982
        %v1081 = vunpack.c.h.b16 %v982
        %v1082 = vunpack.c.l.b16 %v983
        %v1083 = vunpack.c.h.b16 %v983
        %v1084 = vunpack.c.l.b16 %v984
        %v1085 = vunpack.c.h.b16 %v984
        %v1086 = vunpack.c.l.b16 %v985
        %v1087 = vunpack.c.h.b16 %v985
        %v1088 = vunpack.c.l.b16 %v986
        %v1089 = vunpack.c.h.b16 %v986
        %v1090 = vunpack.c.l.b16 %v987
        %v1091 = vunpack.c.h.b16 %v987
        %v1092 = vunpack.c.l.b16 %v988
        %v1093 = vunpack.c.h.b16 %v988
        %v1094 = vunpack.c.l.b16 %v989
        %v1095 = vunpack.c.h.b16 %v989
        %v1096 = vunpack.c.l.b16 %v990
        %v1097 = vunpack.c.h.b16 %v990
        %v1098 = vunpack.c.l.b16 %v991
        %v1099 = vunpack.c.h.b16 %v991
        %v1100 = vpack.c.b16 %v1038, %v1036
        %v1101 = vpack.c.b16 %v1039, %v1037
        %v1102 = vpack.c.b16 %v1042, %v1040
        %v1103 = vpack.c.b16 %v1043, %v1041
        %v1104 = vpack.c.b16 %v1046, %v1044
        %v1105 = vpack.c.b16 %v1047, %v1045
        %v1106 = vpack.c.b16 %v1050, %v1048
        %v1107 = vpack.c.b16 %v1051, %v1049
        %v1108 = vpack.c.b16 %v1054, %v1052
        %v1109 = vpack.c.b16 %v1055, %v1053
        %v1110 = vpack.c.b16 %v1058, %v1056
        %v1111 = vpack.c.b16 %v1059, %v1057
        %v1112 = vpack.c.b16 %v1062, %v1060
        %v1113 = vpack.c.b16 %v1063, %v1061
        %v1114 = vpack.c.b16 %v1066, %v1064
        %v1115 = vpack.c.b16 %v1067, %v1065
        %v1116 = vpack.c.b16 %v1070, %v1068
        %v1117 = vpack.c.b16 %v1071, %v1069
        %v1118 = vpack.c.b16 %v1074, %v1072
        %v1119 = vpack.c.b16 %v1075, %v1073
        %v1120 = vpack.c.b16 %v1078, %v1076
        %v1121 = vpack.c.b16 %v1079, %v1077
        %v1122 = vpack.c.b16 %v1082, %v1080
        %v1123 = vpack.c.b16 %v1083, %v1081
        %v1124 = vpack.c.b16 %v1086, %v1084
        %v1125 = vpack.c.b16 %v1087, %v1085
        %v1126 = vpack.c.b16 %v1090, %v1088
        %v1127 = vpack.c.b16 %v1091, %v1089
        %v1128 = vpack.c.b16 %v1094, %v1092
        %v1129 = vpack.c.b16 %v1095, %v1093
        %v1130 = vpack.c.b16 %v1098, %v1096
        %v1131 = vpack.c.b16 %v1099, %v1097
        %1164 = vmatprep.subr.bf16.mxu0 %v1101
        %1165 = vmatpush1.bf16.msra.mxu0 %v1100
        %1166 = vmatprep.subr.bf16.mxu0 %v1103
        %1167 = vmatpush1.bf16.msra.mxu0 %v1102
        %1168 = vmatprep.subr.bf16.mxu0 %v1105
        %1169 = vmatpush1.bf16.msra.mxu0 %v1104
        %1170 = vmatprep.subr.bf16.mxu0 %v1107
        %1171 = vmatpush1.bf16.msra.mxu0 %v1106
        %1172 = vmatprep.subr.bf16.mxu0 %v1109
        %1173 = vmatpush1.bf16.msra.mxu0 %v1108
        %1174 = vmatprep.subr.bf16.mxu0 %v1111
        %1175 = vmatpush1.bf16.msra.mxu0 %v1110
        %1176 = vmatprep.subr.bf16.mxu0 %v1113
        %1177 = vmatpush1.bf16.msra.mxu0 %v1112
        %1178 = vmatprep.subr.bf16.mxu0 %v1115
        %1179 = vmatpush1.bf16.msra.mxu0 %v1114
        %1180 = vmatprep.subr.bf16.mxu0 %v1117
        %1181 = vmatpush1.bf16.msra.mxu0 %v1116
        %1182 = vmatprep.subr.bf16.mxu0 %v1119
        %1183 = vmatpush1.bf16.msra.mxu0 %v1118
        %1184 = vmatprep.subr.bf16.mxu0 %v1121
        %1185 = vmatpush1.bf16.msra.mxu0 %v1120
        %1186 = vmatprep.subr.bf16.mxu0 %v1123
        %1187 = vmatpush1.bf16.msra.mxu0 %v1122
        %1188 = vmatprep.subr.bf16.mxu0 %v1125
        %1189 = vmatpush1.bf16.msra.mxu0 %v1124
        %1190 = vmatprep.subr.bf16.mxu0 %v1127
        %1191 = vmatpush1.bf16.msra.mxu0 %v1126
        %1192 = vmatprep.subr.bf16.mxu0 %v1129
        %1193 = vmatpush1.bf16.msra.mxu0 %v1128
        %1194 = vmatprep.subr.bf16.mxu0 %v1131
        %1195 = vmatpush1.bf16.msra.mxu0 %v1130
        %1196 = vmatprep.mubr.bf16.mxu0 %v929
        %1197 = vmatmul.mubr.bf16.gmra.mrb[0].mxu0 %v928
        %v1198 = vpop.f32.mrb[0].mxu0
        %v1199 = vadd.f32 %v997, %v1198
        %v1200 = vpop.f32.mrb[0].mxu0
        %v1201 = vadd.f32 %v1001, %v1200
        %v1202 = vpop.f32.mrb[0].mxu0
        %v1203 = vadd.f32 %v997, %v1202
        %v1204 = vpop.f32.mrb[0].mxu0
        %v1205 = vadd.f32 %v1001, %v1204
        %1206 = vmatprep.mubr.bf16.mxu0 %v931
        %1207 = vmatmul.mubr.bf16.gmra.mrb[0].mxu0 %v930
        %v1208 = vpop.f32.mrb[0].mxu0
        %v1209 = vadd.f32 %v997, %v1208
        %v1210 = vpop.f32.mrb[0].mxu0
        %v1211 = vadd.f32 %v1001, %v1210
        %v1212 = vpop.f32.mrb[0].mxu0
        %v1213 = vadd.f32 %v997, %v1212
        %v1214 = vpop.f32.mrb[0].mxu0
        %v1215 = vadd.f32 %v1001, %v1214
        %1216 = vmatprep.mubr.bf16.mxu0 %v933
        %1217 = vmatmul.mubr.bf16.gmra.mrb[0].mxu0 %v932
        %v1218 = vpop.f32.mrb[0].mxu0
        %v1219 = vadd.f32 %v997, %v1218
        %v1220 = vpop.f32.mrb[0].mxu0
        %v1221 = vadd.f32 %v1001, %v1220
        %v1222 = vpop.f32.mrb[0].mxu0
        %v1223 = vadd.f32 %v997, %v1222
        %v1224 = vpop.f32.mrb[0].mxu0
        %v1225 = vadd.f32 %v1001, %v1224
        %1226 = vmatprep.mubr.bf16.mxu0 %v935
        %1227 = vmatmul.mubr.bf16.gmra.mrb[0].mxu0 %v934
        %v1228 = vpop.f32.mrb[0].mxu0
        %v1229 = vadd.f32 %v997, %v1228
        %v1230 = vpop.f32.mrb[0].mxu0
        %v1231 = vadd.f32 %v1001, %v1230
        %v1232 = vpop.f32.mrb[0].mxu0
        %v1233 = vadd.f32 %v997, %v1232
        %v1234 = vpop.f32.mrb[0].mxu0
        %v1235 = vadd.f32 %v1001, %v1234
        %1236 = vmatprep.mubr.bf16.mxu0 %v937
        %1237 = vmatmul.mubr.bf16.gmra.mrb[0].mxu0 %v936
        %v1238 = vpop.f32.mrb[0].mxu0
        %v1239 = vadd.f32 %v997, %v1238
        %v1240 = vpop.f32.mrb[0].mxu0
        %v1241 = vadd.f32 %v1001, %v1240
        %v1242 = vpop.f32.mrb[0].mxu0
        %v1243 = vadd.f32 %v997, %v1242
        %v1244 = vpop.f32.mrb[0].mxu0
        %v1245 = vadd.f32 %v1001, %v1244
        %1246 = vmatprep.mubr.bf16.mxu0 %v939
        %1247 = vmatmul.mubr.bf16.gmra.mrb[0].mxu0 %v938
        %v1248 = vpop.f32.mrb[0].mxu0
        %v1249 = vadd.f32 %v997, %v1248
        %v1250 = vpop.f32.mrb[0].mxu0
        %v1251 = vadd.f32 %v1001, %v1250
        %v1252 = vpop.f32.mrb[0].mxu0
        %v1253 = vadd.f32 %v997, %v1252
        %v1254 = vpop.f32.mrb[0].mxu0
        %v1255 = vadd.f32 %v1001, %v1254
        %1256 = vmatprep.mubr.bf16.mxu0 %v941
        %1257 = vmatmul.mubr.bf16.gmra.mrb[0].mxu0 %v940
        %v1258 = vpop.f32.mrb[0].mxu0
        %v1259 = vadd.f32 %v997, %v1258
        %v1260 = vpop.f32.mrb[0].mxu0
        %v1261 = vadd.f32 %v1001, %v1260
        %v1262 = vpop.f32.mrb[0].mxu0
        %v1263 = vadd.f32 %v997, %v1262
        %v1264 = vpop.f32.mrb[0].mxu0
        %v1265 = vadd.f32 %v1001, %v1264
        %1266 = vmatprep.mubr.bf16.mxu0 %v943
        %1267 = vmatmul.mubr.bf16.gmra.mrb[0].mxu0 %v942
        %v1268 = vpop.f32.mrb[0].mxu0
        %v1269 = vadd.f32 %v997, %v1268
        %v1270 = vpop.f32.mrb[0].mxu0
        %v1271 = vadd.f32 %v1001, %v1270
        %v1272 = vpop.f32.mrb[0].mxu0
        %v1273 = vadd.f32 %v997, %v1272
        %v1274 = vpop.f32.mrb[0].mxu0
        %v1275 = vadd.f32 %v1001, %v1274
        %1276 = vmatprep.mubr.bf16.mxu0 %v945
        %1277 = vmatmul.mubr.bf16.gmra.mrb[0].mxu0 %v944
        %v1278 = vpop.f32.mrb[0].mxu0
        %v1279 = vadd.f32 %v997, %v1278
        %v1280 = vpop.f32.mrb[0].mxu0
        %v1281 = vadd.f32 %v1001, %v1280
        %v1282 = vpop.f32.mrb[0].mxu0
        %v1283 = vadd.f32 %v997, %v1282
        %v1284 = vpop.f32.mrb[0].mxu0
        %v1285 = vadd.f32 %v1001, %v1284
        %1286 = vmatprep.mubr.bf16.mxu0 %v947
        %1287 = vmatmul.mubr.bf16.gmra.mrb[0].mxu0 %v946
        %v1288 = vpop.f32.mrb[0].mxu0
        %v1289 = vadd.f32 %v997, %v1288
        %v1290 = vpop.f32.mrb[0].mxu0
        %v1291 = vadd.f32 %v1001, %v1290
        %v1292 = vpop.f32.mrb[0].mxu0
        %v1293 = vadd.f32 %v997, %v1292
        %v1294 = vpop.f32.mrb[0].mxu0
        %v1295 = vadd.f32 %v1001, %v1294
        %1296 = vmatprep.mubr.bf16.mxu0 %v949
        %1297 = vmatmul.mubr.bf16.gmra.mrb[0].mxu0 %v948
        %v1298 = vpop.f32.mrb[0].mxu0
        %v1299 = vadd.f32 %v997, %v1298
        %v1300 = vpop.f32.mrb[0].mxu0
        %v1301 = vadd.f32 %v1001, %v1300
        %v1302 = vpop.f32.mrb[0].mxu0
        %v1303 = vadd.f32 %v997, %v1302
        %v1304 = vpop.f32.mrb[0].mxu0
        %v1305 = vadd.f32 %v1001, %v1304
        %1306 = vmatprep.mubr.bf16.mxu0 %v951
        %1307 = vmatmul.mubr.bf16.gmra.mrb[0].mxu0 %v950
        %v1308 = vpop.f32.mrb[0].mxu0
        %v1309 = vadd.f32 %v997, %v1308
        %v1310 = vpop.f32.mrb[0].mxu0
        %v1311 = vadd.f32 %v1001, %v1310
        %v1312 = vpop.f32.mrb[0].mxu0
        %v1313 = vadd.f32 %v997, %v1312
        %v1314 = vpop.f32.mrb[0].mxu0
        %v1315 = vadd.f32 %v1001, %v1314
        %1316 = vmatprep.mubr.bf16.mxu0 %v953
        %1317 = vmatmul.mubr.bf16.gmra.mrb[0].mxu0 %v952
        %v1318 = vpop.f32.mrb[0].mxu0
        %v1319 = vadd.f32 %v997, %v1318
        %v1320 = vpop.f32.mrb[0].mxu0
        %v1321 = vadd.f32 %v1001, %v1320
        %v1322 = vpop.f32.mrb[0].mxu0
        %v1323 = vadd.f32 %v997, %v1322
        %v1324 = vpop.f32.mrb[0].mxu0
        %v1325 = vadd.f32 %v1001, %v1324
        %1326 = vmatprep.mubr.bf16.mxu0 %v955
        %1327 = vmatmul.mubr.bf16.gmra.mrb[0].mxu0 %v954
        %v1328 = vpop.f32.mrb[0].mxu0
        %v1329 = vadd.f32 %v997, %v1328
        %v1330 = vpop.f32.mrb[0].mxu0
        %v1331 = vadd.f32 %v1001, %v1330
        %v1332 = vpop.f32.mrb[0].mxu0
        %v1333 = vadd.f32 %v997, %v1332
        %v1334 = vpop.f32.mrb[0].mxu0
        %v1335 = vadd.f32 %v1001, %v1334
        %1336 = vmatprep.mubr.bf16.mxu0 %v957
        %1337 = vmatmul.mubr.bf16.gmra.mrb[0].mxu0 %v956
        %v1338 = vpop.f32.mrb[0].mxu0
        %v1339 = vadd.f32 %v997, %v1338
        %v1340 = vpop.f32.mrb[0].mxu0
        %v1341 = vadd.f32 %v1001, %v1340
        %v1342 = vpop.f32.mrb[0].mxu0
        %v1343 = vadd.f32 %v997, %v1342
        %v1344 = vpop.f32.mrb[0].mxu0
        %v1345 = vadd.f32 %v1001, %v1344
        %1346 = vmatprep.mubr.bf16.mxu0 %v959
        %1347 = vmatmul.mubr.bf16.gmra.mrb[0].mxu0 %v958
        %v1348 = vpop.f32.mrb[0].mxu0
        %v1349 = vadd.f32 %v997, %v1348
        %v1350 = vpop.f32.mrb[0].mxu0
        %v1351 = vadd.f32 %v1001, %v1350
        %v1352 = vpop.f32.mrb[0].mxu0
        %v1353 = vadd.f32 %v997, %v1352
        %v1354 = vpop.f32.mrb[0].mxu0
        %v1355 = vadd.f32 %v1001, %v1354
        %1356 = vdwg.mxu0
        %v1357 = vunpack.c.l.bf16 %v275
        %v1358 = vunpack.c.h.bf16 %v275
        %v1359 = vunpack.c.l.bf16 %v276
        %v1360 = vunpack.c.h.bf16 %v276
        %v1361 = vunpack.c.l.bf16 %v277
        %v1362 = vunpack.c.h.bf16 %v277
        %v1363 = vunpack.c.l.bf16 %v278
        %v1364 = vunpack.c.h.bf16 %v278
        %v1365 = vunpack.c.l.bf16 %v279
        %v1366 = vunpack.c.h.bf16 %v279
        %v1367 = vunpack.c.l.bf16 %v280
        %v1368 = vunpack.c.h.bf16 %v280
        %v1369 = vunpack.c.l.bf16 %v281
        %v1370 = vunpack.c.h.bf16 %v281
        %v1371 = vunpack.c.l.bf16 %v282
        %v1372 = vunpack.c.h.bf16 %v282
        %v1373 = vunpack.c.l.bf16 %v283
        %v1374 = vunpack.c.h.bf16 %v283
        %v1375 = vunpack.c.l.bf16 %v284
        %v1376 = vunpack.c.h.bf16 %v284
        %v1377 = vunpack.c.l.bf16 %v285
        %v1378 = vunpack.c.h.bf16 %v285
        %v1379 = vunpack.c.l.bf16 %v286
        %v1380 = vunpack.c.h.bf16 %v286
        %v1381 = vunpack.c.l.bf16 %v287
        %v1382 = vunpack.c.h.bf16 %v287
        %v1383 = vunpack.c.l.bf16 %v288
        %v1384 = vunpack.c.h.bf16 %v288
        %v1385 = vunpack.c.l.bf16 %v289
        %v1386 = vunpack.c.h.bf16 %v289
        %v1387 = vunpack.c.l.bf16 %v290
        %v1388 = vunpack.c.h.bf16 %v290
        %v1389 = vunpack.c.l.bf16 %v291
        %v1390 = vunpack.c.h.bf16 %v291
        %v1391 = vunpack.c.l.bf16 %v292
        %v1392 = vunpack.c.h.bf16 %v292
        %v1393 = vunpack.c.l.bf16 %v293
        %v1394 = vunpack.c.h.bf16 %v293
        %v1395 = vunpack.c.l.bf16 %v294
        %v1396 = vunpack.c.h.bf16 %v294
        %v1397 = vunpack.c.l.bf16 %v295
        %v1398 = vunpack.c.h.bf16 %v295
        %v1399 = vunpack.c.l.bf16 %v296
        %v1400 = vunpack.c.h.bf16 %v296
        %v1401 = vunpack.c.l.bf16 %v297
        %v1402 = vunpack.c.h.bf16 %v297
        %v1403 = vunpack.c.l.bf16 %v298
        %v1404 = vunpack.c.h.bf16 %v298
        %v1405 = vunpack.c.l.bf16 %v299
        %v1406 = vunpack.c.h.bf16 %v299
        %v1407 = vunpack.c.l.bf16 %v300
        %v1408 = vunpack.c.h.bf16 %v300
        %v1409 = vunpack.c.l.bf16 %v301
        %v1410 = vunpack.c.h.bf16 %v301
        %v1411 = vunpack.c.l.bf16 %v302
        %v1412 = vunpack.c.h.bf16 %v302
        %v1413 = vunpack.c.l.bf16 %v303
        %v1414 = vunpack.c.h.bf16 %v303
        %v1415 = vunpack.c.l.bf16 %v304
        %v1416 = vunpack.c.h.bf16 %v304
        %v1417 = vunpack.c.l.bf16 %v305
        %v1418 = vunpack.c.h.bf16 %v305
        %v1419 = vunpack.c.l.bf16 %v306
        %v1420 = vunpack.c.h.bf16 %v306
        %v1421 = vadd.f32 %v1199, %v1357
        %v1422 = vadd.f32 %v1201, %v1358
        %v1423 = vadd.f32 %v1203, %v1359
        %v1424 = vadd.f32 %v1205, %v1360
        %v1425 = vadd.f32 %v1209, %v1361
        %v1426 = vadd.f32 %v1211, %v1362
        %v1427 = vadd.f32 %v1213, %v1363
        %v1428 = vadd.f32 %v1215, %v1364
        %v1429 = vadd.f32 %v1219, %v1365
        %v1430 = vadd.f32 %v1221, %v1366
        %v1431 = vadd.f32 %v1223, %v1367
        %v1432 = vadd.f32 %v1225, %v1368
        %v1433 = vadd.f32 %v1229, %v1369
        %v1434 = vadd.f32 %v1231, %v1370
        %v1435 = vadd.f32 %v1233, %v1371
        %v1436 = vadd.f32 %v1235, %v1372
        %v1437 = vadd.f32 %v1239, %v1373
        %v1438 = vadd.f32 %v1241, %v1374
        %v1439 = vadd.f32 %v1243, %v1375
        %v1440 = vadd.f32 %v1245, %v1376
        %v1441 = vadd.f32 %v1249, %v1377
        %v1442 = vadd.f32 %v1251, %v1378
        %v1443 = vadd.f32 %v1253, %v1379
        %v1444 = vadd.f32 %v1255, %v1380
        %v1445 = vadd.f32 %v1259, %v1381
        %v1446 = vadd.f32 %v1261, %v1382
        %v1447 = vadd.f32 %v1263, %v1383
        %v1448 = vadd.f32 %v1265, %v1384
        %v1449 = vadd.f32 %v1269, %v1385
        %v1450 = vadd.f32 %v1271, %v1386
        %v1451 = vadd.f32 %v1273, %v1387
        %v1452 = vadd.f32 %v1275, %v1388
        %v1453 = vadd.f32 %v1279, %v1389
        %v1454 = vadd.f32 %v1281, %v1390
        %v1455 = vadd.f32 %v1283, %v1391
        %v1456 = vadd.f32 %v1285, %v1392
        %v1457 = vadd.f32 %v1289, %v1393
        %v1458 = vadd.f32 %v1291, %v1394
        %v1459 = vadd.f32 %v1293, %v1395
        %v1460 = vadd.f32 %v1295, %v1396
        %v1461 = vadd.f32 %v1299, %v1397
        %v1462 = vadd.f32 %v1301, %v1398
        %v1463 = vadd.f32 %v1303, %v1399
        %v1464 = vadd.f32 %v1305, %v1400
        %v1465 = vadd.f32 %v1309, %v1401
        %v1466 = vadd.f32 %v1311, %v1402
        %v1467 = vadd.f32 %v1313, %v1403
        %v1468 = vadd.f32 %v1315, %v1404
        %v1469 = vadd.f32 %v1319, %v1405
        %v1470 = vadd.f32 %v1321, %v1406
        %v1471 = vadd.f32 %v1323, %v1407
        %v1472 = vadd.f32 %v1325, %v1408
        %v1473 = vadd.f32 %v1329, %v1409
        %v1474 = vadd.f32 %v1331, %v1410
        %v1475 = vadd.f32 %v1333, %v1411
        %v1476 = vadd.f32 %v1335, %v1412
        %v1477 = vadd.f32 %v1339, %v1413
        %v1478 = vadd.f32 %v1341, %v1414
        %v1479 = vadd.f32 %v1343, %v1415
        %v1480 = vadd.f32 %v1345, %v1416
        %v1481 = vadd.f32 %v1349, %v1417
        %v1482 = vadd.f32 %v1351, %v1418
        %v1483 = vadd.f32 %v1353, %v1419
        %v1484 = vadd.f32 %v1355, %v1420
        %v1485 = vmax.f32 %v1421, 0.0
        %v1486 = vmax.f32 %v1422, 0.0
        %v1487 = vmax.f32 %v1423, 0.0
        %v1488 = vmax.f32 %v1424, 0.0
        %v1489 = vmax.f32 %v1425, 0.0
        %v1490 = vmax.f32 %v1426, 0.0
        %v1491 = vmax.f32 %v1427, 0.0
        %v1492 = vmax.f32 %v1428, 0.0
        %v1493 = vmax.f32 %v1429, 0.0
        %v1494 = vmax.f32 %v1430, 0.0
        %v1495 = vmax.f32 %v1431, 0.0
        %v1496 = vmax.f32 %v1432, 0.0
        %v1497 = vmax.f32 %v1433, 0.0
        %v1498 = vmax.f32 %v1434, 0.0
        %v1499 = vmax.f32 %v1435, 0.0
        %v1500 = vmax.f32 %v1436, 0.0
        %v1501 = vmax.f32 %v1437, 0.0
        %v1502 = vmax.f32 %v1438, 0.0
        %v1503 = vmax.f32 %v1439, 0.0
        %v1504 = vmax.f32 %v1440, 0.0
        %v1505 = vmax.f32 %v1441, 0.0
        %v1506 = vmax.f32 %v1442, 0.0
        %v1507 = vmax.f32 %v1443, 0.0
        %v1508 = vmax.f32 %v1444, 0.0
        %v1509 = vmax.f32 %v1445, 0.0
        %v1510 = vmax.f32 %v1446, 0.0
        %v1511 = vmax.f32 %v1447, 0.0
        %v1512 = vmax.f32 %v1448, 0.0
        %v1513 = vmax.f32 %v1449, 0.0
        %v1514 = vmax.f32 %v1450, 0.0
        %v1515 = vmax.f32 %v1451, 0.0
        %v1516 = vmax.f32 %v1452, 0.0
        %v1517 = vmax.f32 %v1453, 0.0
        %v1518 = vmax.f32 %v1454, 0.0
        %v1519 = vmax.f32 %v1455, 0.0
        %v1520 = vmax.f32 %v1456, 0.0
        %v1521 = vmax.f32 %v1457, 0.0
        %v1522 = vmax.f32 %v1458, 0.0
        %v1523 = vmax.f32 %v1459, 0.0
        %v1524 = vmax.f32 %v1460, 0.0
        %v1525 = vmax.f32 %v1461, 0.0
        %v1526 = vmax.f32 %v1462, 0.0
        %v1527 = vmax.f32 %v1463, 0.0
        %v1528 = vmax.f32 %v1464, 0.0
        %v1529 = vmax.f32 %v1465, 0.0
        %v1530 = vmax.f32 %v1466, 0.0
        %v1531 = vmax.f32 %v1467, 0.0
        %v1532 = vmax.f32 %v1468, 0.0
        %v1533 = vmax.f32 %v1469, 0.0
        %v1534 = vmax.f32 %v1470, 0.0
        %v1535 = vmax.f32 %v1471, 0.0
        %v1536 = vmax.f32 %v1472, 0.0
        %v1537 = vmax.f32 %v1473, 0.0
        %v1538 = vmax.f32 %v1474, 0.0
        %v1539 = vmax.f32 %v1475, 0.0
        %v1540 = vmax.f32 %v1476, 0.0
        %v1541 = vmax.f32 %v1477, 0.0
        %v1542 = vmax.f32 %v1478, 0.0
        %v1543 = vmax.f32 %v1479, 0.0
        %v1544 = vmax.f32 %v1480, 0.0
        %v1545 = vmax.f32 %v1481, 0.0
        %v1546 = vmax.f32 %v1482, 0.0
        %v1547 = vmax.f32 %v1483, 0.0
        %v1548 = vmax.f32 %v1484, 0.0
        %1549 = vst [vmem:[%s272] sm:$0xff] %v1485
        %1550 = vst [vmem:[%s272 + $0x8] sm:$0xff] %v1486
        %1551 = vst [vmem:[%s272 + $0x10] sm:$0xff] %v1487
        %1552 = vst [vmem:[%s272 + $0x18] sm:$0xff] %v1488
        %1553 = vst [vmem:[%s272 + $0x20] sm:$0xff] %v1489
        %1554 = vst [vmem:[%s272 + $0x28] sm:$0xff] %v1490
        %1555 = vst [vmem:[%s272 + $0x30] sm:$0xff] %v1491
        %1556 = vst [vmem:[%s272 + $0x38] sm:$0xff] %v1492
        %1557 = vst [vmem:[%s272 + $0x40] sm:$0xff] %v1493
        %1558 = vst [vmem:[%s272 + $0x48] sm:$0xff] %v1494
        %1559 = vst [vmem:[%s272 + $0x50] sm:$0xff] %v1495
        %1560 = vst [vmem:[%s272 + $0x58] sm:$0xff] %v1496
        %1561 = vst [vmem:[%s272 + $0x60] sm:$0xff] %v1497
        %1562 = vst [vmem:[%s272 + $0x68] sm:$0xff] %v1498
        %1563 = vst [vmem:[%s272 + $0x70] sm:$0xff] %v1499
        %1564 = vst [vmem:[%s272 + $0x78] sm:$0xff] %v1500
        %1565 = vst [vmem:[%s272 + $0x80] sm:$0xff] %v1501
        %1566 = vst [vmem:[%s272 + $0x88] sm:$0xff] %v1502
        %1567 = vst [vmem:[%s272 + $0x90] sm:$0xff] %v1503
        %1568 = vst [vmem:[%s272 + $0x98] sm:$0xff] %v1504
        %1569 = vst [vmem:[%s272 + $0xa0] sm:$0xff] %v1505
        %1570 = vst [vmem:[%s272 + $0xa8] sm:$0xff] %v1506
        %1571 = vst [vmem:[%s272 + $0xb0] sm:$0xff] %v1507
        %1572 = vst [vmem:[%s272 + $0xb8] sm:$0xff] %v1508
        %1573 = vst [vmem:[%s272 + $0xc0] sm:$0xff] %v1509
        %1574 = vst [vmem:[%s272 + $0xc8] sm:$0xff] %v1510
        %1575 = vst [vmem:[%s272 + $0xd0] sm:$0xff] %v1511
        %1576 = vst [vmem:[%s272 + $0xd8] sm:$0xff] %v1512
        %1577 = vst [vmem:[%s272 + $0xe0] sm:$0xff] %v1513
        %1578 = vst [vmem:[%s272 + $0xe8] sm:$0xff] %v1514
        %1579 = vst [vmem:[%s272 + $0xf0] sm:$0xff] %v1515
        %1580 = vst [vmem:[%s272 + $0xf8] sm:$0xff] %v1516
        %1581 = vst [vmem:[%s272 + $0x100] sm:$0xff] %v1517
        %1582 = vst [vmem:[%s272 + $0x108] sm:$0xff] %v1518
        %1583 = vst [vmem:[%s272 + $0x110] sm:$0xff] %v1519
        %1584 = vst [vmem:[%s272 + $0x118] sm:$0xff] %v1520
        %1585 = vst [vmem:[%s272 + $0x120] sm:$0xff] %v1521
        %1586 = vst [vmem:[%s272 + $0x128] sm:$0xff] %v1522
        %1587 = vst [vmem:[%s272 + $0x130] sm:$0xff] %v1523
        %1588 = vst [vmem:[%s272 + $0x138] sm:$0xff] %v1524
        %1589 = vst [vmem:[%s272 + $0x140] sm:$0xff] %v1525
        %1590 = vst [vmem:[%s272 + $0x148] sm:$0xff] %v1526
        %1591 = vst [vmem:[%s272 + $0x150] sm:$0xff] %v1527
        %1592 = vst [vmem:[%s272 + $0x158] sm:$0xff] %v1528
        %1593 = vst [vmem:[%s272 + $0x160] sm:$0xff] %v1529
        %1594 = vst [vmem:[%s272 + $0x168] sm:$0xff] %v1530
        %1595 = vst [vmem:[%s272 + $0x170] sm:$0xff] %v1531
        %1596 = vst [vmem:[%s272 + $0x178] sm:$0xff] %v1532
        %1597 = vst [vmem:[%s272 + $0x180] sm:$0xff] %v1533
        %1598 = vst [vmem:[%s272 + $0x188] sm:$0xff] %v1534
        %1599 = vst [vmem:[%s272 + $0x190] sm:$0xff] %v1535
        %1600 = vst [vmem:[%s272 + $0x198] sm:$0xff] %v1536
        %1601 = vst [vmem:[%s272 + $0x1a0] sm:$0xff] %v1537
        %1602 = vst [vmem:[%s272 + $0x1a8] sm:$0xff] %v1538
        %1603 = vst [vmem:[%s272 + $0x1b0] sm:$0xff] %v1539
        %1604 = vst [vmem:[%s272 + $0x1b8] sm:$0xff] %v1540
        %1605 = vst [vmem:[%s272 + $0x1c0] sm:$0xff] %v1541
        %1606 = vst [vmem:[%s272 + $0x1c8] sm:$0xff] %v1542
        %1607 = vst [vmem:[%s272 + $0x1d0] sm:$0xff] %v1543
        %1608 = vst [vmem:[%s272 + $0x1d8] sm:$0xff] %v1544
        %1609 = vst [vmem:[%s272 + $0x1e0] sm:$0xff] %v1545
        %1610 = vst [vmem:[%s272 + $0x1e8] sm:$0xff] %v1546
        %1611 = vst [vmem:[%s272 + $0x1f0] sm:$0xff] %v1547
        %1612 = vst [vmem:[%s272 + $0x1f8] sm:$0xff] %v1548
        %s1613 = sand.u32 %s141, 1
        %s1614 = scalar_lea.sflag [#allocation4], %s1613
        %s1615 = sand.u32 %s141, 1
        %s1616 = smul.addr %s1615, 512
        %s1617 = scalar_lea.vmem [#allocation8], %s1616
        // Predicated region
        $region53: #{tpu_custom_call.1} parent=39 // pred_check
          %p1618 = pneg %p151
        $region54: #{tpu_custom_call.1} parent=39 // pred_check_branch
          %1620 = sbr.rel (%p1618) target = $region56
        $region55: #{tpu_custom_call.1} parent=39 // pred_region
          %s1621 = smul.u32 32, %s23
          %s1623 = ssub.s32 8192, 8192
          %1624 = vsyncadd %s1614, %s1623
          %s1625 = smul.addr %s1621, 2
          %s1626 = smul.addr %s1625, 128
          %s1627 = scalar_lea.hbm %s5, %s1626
          %s1628 = sshll.u32 %s1617, 4
          %s1629 = int_to_ptr.vmem [resolvable:$true] %s1628
          %1634 = dma.vmem_to_hbm [thread:$0]  %s1629, 8192, %s1627, %s1614, 256, 256, 16
        $region56: #{tpu_custom_call.1} parent=39 // pred_fallthru
          _
      $region40: #{tpu_custom_call.1} parent=5 // pred_fallthru
        _
      %p1635 = scmp.le.s32.totalorder 2, %s18
      // Predicated region
      $region57: #{tpu_custom_call.1} parent=5 // pred_check
        %p1636 = pneg %p1635
      $region58: #{tpu_custom_call.1} parent=5 // pred_check_branch
        %1638 = sbr.rel (%p1636) target = $region60
      $region59: #{tpu_custom_call.1} parent=5 // pred_region
        %s1639 = ssub.s32 %s18, 2
        // Predicated region
        $region61: #{tpu_custom_call.1} parent=59 // pred_check
          %p1640 = pneg %p157
        $region62: #{tpu_custom_call.1} parent=59 // pred_check_branch
          %1642 = sbr.rel (%p1640) target = $region64
        $region63: #{tpu_custom_call.1} parent=59 // pred_region
          %s1643 = sand.u32 %s142, 1
          %s1644 = scalar_lea.sflag [#allocation4], %s1643
          %s1645 = sand.u32 %s142, 1
          %s1646 = smul.addr %s1645, 512
          %s1647 = scalar_lea.vmem [#allocation8], %s1646
          %1648 = dma.done %s1644, 8192
        $region64: #{tpu_custom_call.1} parent=59 // pred_fallthru
          _
      $region60: #{tpu_custom_call.1} parent=5 // pred_fallthru
        _
    $region6: #{tpu_custom_call.1} parent=1 // loop_footer
      %s22 = sadd.s32 1, %s18
    $region7: #{tpu_custom_call.1} parent=1 // loop_footer_branch
      %17 = sbr.rel target = $region3
    $region8: #{tpu_custom_call.1} parent=1 // loop_exit
      _
    %1649 = vsyncpa [#allocation3], 1
    %s1650 = scalar_lea.sflag [#allocation3], 1
    %1651 = vsyncpa %s1650, 1
    %1652 = vsyncpa [#allocation6], 1
    %1653 = vsyncpa [#allocation4], 1
    %s1654 = scalar_lea.sflag [#allocation4], 1
    %1655 = vsyncpa %s1654, 1

</llo_original>
